<compile_context>
chip_gen: v7x
topology: tpu7x:2x2x1
jax: 0.10.0
libtpu: 0.0.40
codegen_flags: <defaults>
</compile_context>

<pallas_src>
import functools

import jax
import jax.numpy as jnp
from jax.experimental import pallas as pl
from jax.experimental.pallas import tpu as pltpu


# ----------------------------------------------------------------------------
# Fused decoder-stack kernel: one grid step = (batch chunk g, layer l).
# The output block doubles as the resident activation carry across layers.
# ----------------------------------------------------------------------------
def fft_stack_kernel(x_ref, kbias_ref, npad_ref,
                     wqkv_ref, bqkv_ref, wo_ref, vec_ref,
                     w1_ref, b1_ref, w2_ref,
                     o_ref, *, n_head, d_k, conv_ks):
    l = pl.program_id(1)

    # Layer 0: seed the carry.  o_ref's block index is constant across l, so it
    # stays resident in VMEM and is flushed to HBM only when the chunk changes.
    @pl.when(l == 0)
    def _():
        o_ref[...] = x_ref[...]

    TB, S, D = o_ref.shape
    M = TB * S
    d_ff = w2_ref.shape[1]

    x3 = o_ref[...]                        # (TB, S, D) f32 activation carry
    x2 = x3.reshape(M, D)                  # fold batch into matmul M dim
    x_bf = x2.astype(jnp.bfloat16)

    kbias = kbias_ref[...]                 # (TB, 1, S) additive key-pad bias
    npad = npad_ref[...]                   # (M, 1) non-pad mask

    vecs = vec_ref[0]                      # (6, D): bo, g1, be1, b2, g2, be2
    bo, g1, be1, b2, g2, be2 = (vecs[i:i + 1, :] for i in range(6))

    inv_temp = 1.0 / jnp.sqrt(jnp.float32(d_k))

    # ---------------- multi-head self attention ----------------
    # Fused QKV projection: one lane-dense (M, D) x (D, 3D) matmul.
    qkv = jnp.dot(x_bf, wqkv_ref[0],
                  preferred_element_type=jnp.float32) + bqkv_ref[0]   # (M, 3D)
    qkv = qkv.reshape(TB, S, 3 * D)

    wo = wo_ref[0]                         # (D, D) bf16, rows grouped per head
    heads_aligned = (d_k % 128 == 0)       # true for real FastSpeech (dk=128)
    head_ctx = []
    attn = jnp.zeros((M, D), jnp.float32)
    for h in range(n_head):                # static unroll over heads
        q = qkv[:, :, h * d_k:(h + 1) * d_k].astype(jnp.bfloat16)
        k = qkv[:, :, D + h * d_k:D + (h + 1) * d_k].astype(jnp.bfloat16)
        v = qkv[:, :, 2 * D + h * d_k:2 * D + (h + 1) * d_k].astype(jnp.bfloat16)

        s = jnp.einsum('bqd,bkd->bqk', q, k,
                       preferred_element_type=jnp.float32) * inv_temp  # (TB,S,S)
        s = s + kbias                                   # pad keys -> -1e9
        s = s - jnp.max(s, axis=-1, keepdims=True)
        p = jnp.exp(s)
        p = p / jnp.sum(p, axis=-1, keepdims=True)      # exact softmax (parity)

        ctx = jnp.einsum('bqk,bkd->bqd', p.astype(jnp.bfloat16), v,
                         preferred_element_type=jnp.float32)           # (TB,S,dk)
        if heads_aligned:
            # fused output projection: gather head contexts, one (D,D) matmul
            head_ctx.append(ctx.reshape(M, d_k).astype(jnp.bfloat16))
        else:
            # tiny/unaligned dk: per-head accumulate (K = dk contraction)
            attn = attn + jnp.dot(ctx.reshape(M, d_k).astype(jnp.bfloat16),
                                  wo[h * d_k:(h + 1) * d_k, :],
                                  preferred_element_type=jnp.float32)
    if heads_aligned:
        ctx_all = jnp.concatenate(head_ctx, axis=-1)                   # (M, D)
        attn = jnp.dot(ctx_all, wo, preferred_element_type=jnp.float32)
    attn = attn + bo

    # residual + LayerNorm 1 + non_pad mask (f32 vector math)
    y = attn + x2
    mu = jnp.mean(y, axis=-1, keepdims=True)
    var = jnp.mean((y - mu) ** 2, axis=-1, keepdims=True)
    y = (y - mu) * jax.lax.rsqrt(var + 1e-5) * g1 + be1
    y = y * npad

    # -------- position-wise feed-forward: conv1d(k=9) -> ReLU -> conv1d(k=1) --------
    residual = y
    pad = (conv_ks - 1) // 2
    # Batch-local position; rolls on the flattened (M, D) slab are cyclic over
    # M, and the position mask zeroes any row pulled across a batch boundary
    # (or the cyclic wraparound), so zero-padding semantics are preserved.
    pos = jax.lax.broadcasted_iota(jnp.int32, (M, 1), 0) % S
    w1 = w1_ref[0]                          # (9*D, Dff) bf16, rows grouped per tap
    conv_aligned = (D % 128 == 0)           # true for real FastSpeech (D=256)
    taps = []
    h_acc = jnp.zeros((M, d_ff), jnp.float32)
    for t in range(conv_ks):                # shifts via XLU roll (free-ish slot)
        off = t - pad
        shifted = pltpu.roll(y, shift=(-off) % M, axis=0)   # shifted[i] = y[(i+off)%M]
        valid = jnp.logical_and(pos + off >= 0, pos + off < S)
        shifted = jnp.where(valid, shifted, 0.0)
        if conv_aligned:
            taps.append(shifted.astype(jnp.bfloat16))
        else:
            h_acc = h_acc + jnp.dot(shifted.astype(jnp.bfloat16),
                                    w1[t * D:(t + 1) * D, :],
                                    preferred_element_type=jnp.float32)
    if conv_aligned:
        # single K = 9D matmul over lane-concatenated shifted tiles
        h_acc = jnp.dot(jnp.concatenate(taps, axis=-1), w1,
                        preferred_element_type=jnp.float32)
    h_act = jnp.maximum(h_acc + b1_ref[0], 0.0)              # ReLU (f32)
    z = jnp.dot(h_act.astype(jnp.bfloat16), w2_ref[0],
                preferred_element_type=jnp.float32) + b2      # conv1d(k=1)
    z = z + residual
    mu2 = jnp.mean(z, axis=-1, keepdims=True)
    var2 = jnp.mean((z - mu2) ** 2, axis=-1, keepdims=True)
    z = (z - mu2) * jax.lax.rsqrt(var2 + 1e-5) * g2 + be2
    z = z * npad

    o_ref[...] = z.reshape(TB, S, D)        # single store: carry + final output


def decoder_stack(x, key_bias, non_pad_flat, params, *, n_head, d_k, n_layer,
                  conv_ks=9, batch_block=None):
    B, S, D = x.shape
    # Default: whole batch per grid step (weights fetched once per layer).
    # On v7x (2 TensorCores) set batch_block = B // 2 so the leading "parallel"
    # axis has 2 chunks and both cores are busy (weights then fetched twice).
    TB = B if batch_block is None else batch_block
    assert B % TB == 0
    G = B // TB

    wnames = ["wqkv", "bqkv", "wo", "vecs", "w1", "b1", "w2"]
    weights = [params[n] for n in wnames]

    chunk3 = lambda g, l: (g, 0, 0)          # data blocks: indexed by batch chunk
    layer3 = lambda g, l: (l, 0, 0)          # weight blocks: indexed by layer only

    in_specs = [
        pl.BlockSpec((TB, S, D), chunk3),            # decoder input (read at l==0)
        pl.BlockSpec((TB, 1, S), chunk3),            # additive key-pad bias
        pl.BlockSpec((TB * S, 1), lambda g, l: (g, 0)),  # non-pad mask (rows)
    ] + [pl.BlockSpec((1,) + w.shape[1:], layer3) for w in weights]

    kern = functools.partial(fft_stack_kernel, n_head=n_head, d_k=d_k,
                             conv_ks=conv_ks)
    return pl.pallas_call(
        kern,
        out_shape=jax.ShapeDtypeStruct((B, S, D), jnp.float32),
        grid=(G, n_layer),
        in_specs=in_specs,
        out_specs=pl.BlockSpec((TB, S, D), chunk3),  # resident across layer axis
        compiler_params=pltpu.CompilerParams(
            dimension_semantics=("parallel", "arbitrary"),
            vmem_limit_bytes=64 * 1024 * 1024,
        ),
    )(x, key_bias, non_pad_flat, *weights)


# ----------------------------------------------------------------------------
# Parameter init (deterministic, synthetic) — weights stacked over layers in
# the fused layouts the kernel expects; matmul weights stored in bf16.
# ----------------------------------------------------------------------------
def init_decoder_params(key, cfg):
    D = cfg["encoder_dim"]
    H = cfg["encoder_head"]
    Dff = cfg["encoder_conv1d_filter_size"]
    L = cfg["decoder_n_layer"]
    n_pos = cfg["max_seq_len"] + 1
    K1 = 9  # FastSpeech FFN conv kernel sizes (9, 1)

    keys = jax.random.split(key, 5)
    pos_table = 0.02 * jax.random.normal(keys[0], (n_pos, D), jnp.float32)
    pos_table = pos_table.at[cfg["PAD"]].set(0.0)   # padding_idx row is zero

    def w(k, shape):
        return (0.05 * jax.random.normal(k, shape, jnp.float32)).astype(jnp.bfloat16)

    # TODO(synk): when loading real PyTorch weights, wqkv = concat(Wq.T, Wk.T, Wv.T)
    # per head-major lanes, wo rows grouped per head, and the Conv1d(out,in,k=9)
    # weight must be transposed to the (tap-major rows, Dff lanes) layout used here.
    vecs = jnp.zeros((L, 6, D), jnp.float32)        # rows: bo, g1, be1, b2, g2, be2
    vecs = vecs.at[:, 1].set(1.0)                   # g1 (LayerNorm 1 scale)
    vecs = vecs.at[:, 4].set(1.0)                   # g2 (LayerNorm 2 scale)

    return dict(
        pos_table=pos_table,
        wqkv=w(keys[1], (L, D, 3 * D)),             # [Wq | Wk | Wv], head-major lanes
        wo=w(keys[2], (L, D, D)),                   # rows grouped per head
        w1=w(keys[3], (L, K1 * D, Dff)),            # rows grouped per conv tap
        w2=w(keys[4], (L, Dff, D)),
        bqkv=jnp.zeros((L, 1, 3 * D), jnp.float32),
        b1=jnp.zeros((L, 1, Dff), jnp.float32),
        vecs=vecs,
    )


# ----------------------------------------------------------------------------
# Decoder forward
# ----------------------------------------------------------------------------
def decoder_forward(params, cfg, enc_seq, enc_pos, energy_emb, pitch_emb):
    PAD = cfg["PAD"]
    H = cfg["encoder_head"]
    D = cfg["encoder_dim"]
    dk = D // H
    L = cfg["decoder_n_layer"]
    B, S, _ = enc_seq.shape

    # pad masks: (B,1,S) additive key bias + flattened (B*S,1) non-pad mask
    # (no (B,S,S) broadcast mask is ever materialized)
    key_pad = (enc_pos == PAD)
    key_bias = jnp.where(key_pad, -1e9, 0.0).astype(jnp.float32)[:, None, :]
    non_pad_flat = (enc_pos != PAD).astype(jnp.float32).reshape(B * S, 1)

    # position embedding gather + 4-way add: left to XLA (fuses into one op)
    pos_emb = jnp.take(params["pos_table"], enc_pos, axis=0)
    x = (enc_seq + pos_emb + energy_emb + pitch_emb).astype(jnp.float32)

    return decoder_stack(x, key_bias, non_pad_flat, params,
                         n_head=H, d_k=dk, n_layer=L)


# ----------------------------------------------------------------------------
# main
# ----------------------------------------------------------------------------
if __name__ == "__main__":
    cfg = dict(
        PAD=0,
        max_seq_len=16,
        encoder_dim=32,
        encoder_head=2,
        encoder_conv1d_filter_size=64,
        decoder_n_layer=2,
        dropout=0.1,
    )
    B, S, D = 2, 8, cfg["encoder_dim"]

    key = jax.random.PRNGKey(0)
    k_par, k_seq, k_en, k_pi = jax.random.split(key, 4)
    params = init_decoder_params(k_par, cfg)

    enc_seq = jax.random.normal(k_seq, (B, S, D), jnp.float32)
    energy_emb = jax.random.normal(k_en, (B, S, D), jnp.float32)
    pitch_emb = jax.random.normal(k_pi, (B, S, D), jnp.float32)
    # positions: batch 0 full length, batch 1 has 2 padded tokens at the end
    enc_pos = jnp.array([[1, 2, 3, 4, 5, 6, 7, 8],
                         [1, 2, 3, 4, 5, 6, 0, 0]], dtype=jnp.int32)

    fwd = jax.jit(lambda es, ep, ee, pe: decoder_forward(params, cfg, es, ep, ee, pe))
    out = fwd(enc_seq, enc_pos, energy_emb, pitch_emb)
    jax.block_until_ready(out)
    assert out.shape == (B, S, D)
    assert bool(jnp.all(jnp.isfinite(out)))
    print("KERNEL_OK")
</pallas_src>

<mosaic_0001>
module attributes {stable_mosaic.version = 11 : i64} {
  func.func @fft_stack_kernel(%arg0: i32, %arg1: i32, %arg2: memref<2x8x32xf32, #tpu.memory_space<vmem>>, %arg3: memref<2x1x8xf32, #tpu.memory_space<vmem>>, %arg4: memref<16x1xf32, #tpu.memory_space<vmem>>, %arg5: memref<1x32x96xbf16, #tpu.memory_space<vmem>>, %arg6: memref<1x1x96xf32, #tpu.memory_space<vmem>>, %arg7: memref<1x32x32xbf16, #tpu.memory_space<vmem>>, %arg8: memref<1x6x32xf32, #tpu.memory_space<vmem>>, %arg9: memref<1x288x64xbf16, #tpu.memory_space<vmem>>, %arg10: memref<1x1x64xf32, #tpu.memory_space<vmem>>, %arg11: memref<1x64x32xbf16, #tpu.memory_space<vmem>>, %arg12: memref<2x8x32xf32, #tpu.memory_space<vmem>>) attributes {dimension_semantics = [#tpu.dimension_semantics<parallel>, #tpu.dimension_semantics<arbitrary>], iteration_bounds = array<i64: 1, 2>, scalar_prefetch = 0 : i64, scratch_operands = 0 : i64, tpu.core_type = #tpu.core_type<tc>, window_params = [{transform_indices = @transform_0, window_bounds = array<i64: 2, 8, 32>}, {transform_indices = @transform_1, window_bounds = array<i64: 2, 1, 8>}, {transform_indices = @transform_2, window_bounds = array<i64: 16, 1>}, {transform_indices = @transform_3, window_bounds = array<i64: 1, 32, 96>}, {transform_indices = @transform_4, window_bounds = array<i64: 1, 1, 96>}, {transform_indices = @transform_5, window_bounds = array<i64: 1, 32, 32>}, {transform_indices = @transform_6, window_bounds = array<i64: 1, 6, 32>}, {transform_indices = @transform_7, window_bounds = array<i64: 1, 288, 64>}, {transform_indices = @transform_8, window_bounds = array<i64: 1, 1, 64>}, {transform_indices = @transform_9, window_bounds = array<i64: 1, 64, 32>}, {transform_indices = @transform_10, window_bounds = array<i64: 2, 8, 32>}]} {
    %c0_i32 = arith.constant 0 : i32
    %0 = arith.cmpi eq, %arg1, %c0_i32 : i32
    %1 = arith.extui %0 : i1 to i32
    %c0_i32_0 = arith.constant 0 : i32
    %2 = arith.cmpi ne, %1, %c0_i32_0 : i32
    scf.if %2 {
      %c0_114 = arith.constant 0 : index
      %c0_115 = arith.constant 0 : index
      %c0_116 = arith.constant 0 : index
      %331 = vector.load %arg2[%c0_114, %c0_115, %c0_116] : memref<2x8x32xf32, #tpu.memory_space<vmem>>, vector<2x8x32xf32>
      %c0_117 = arith.constant 0 : index
      %c0_118 = arith.constant 0 : index
      %c0_119 = arith.constant 0 : index
      %332 = vector.load %arg12[%c0_117, %c0_118, %c0_119] : memref<2x8x32xf32, #tpu.memory_space<vmem>>, vector<2x8x32xf32>
      tpu.vector_store %arg12[%c0_117, %c0_118, %c0_119], %331 {strides = array<i32>} : memref<2x8x32xf32, #tpu.memory_space<vmem>>, vector<2x8x32xf32>,
    } else {
    }
    %c0 = arith.constant 0 : index
    %c0_1 = arith.constant 0 : index
    %c0_2 = arith.constant 0 : index
    %3 = vector.load %arg12[%c0, %c0_1, %c0_2] : memref<2x8x32xf32, #tpu.memory_space<vmem>>, vector<2x8x32xf32>
    %4 = vector.shape_cast %3 : vector<2x8x32xf32> to vector<16x32xf32>
    %5 = arith.truncf %4 : vector<16x32xf32> to vector<16x32xbf16>
    %c0_3 = arith.constant 0 : index
    %c0_4 = arith.constant 0 : index
    %c0_5 = arith.constant 0 : index
    %6 = vector.load %arg3[%c0_3, %c0_4, %c0_5] : memref<2x1x8xf32, #tpu.memory_space<vmem>>, vector<2x1x8xf32>
    %c0_6 = arith.constant 0 : index
    %c0_7 = arith.constant 0 : index
    %7 = vector.load %arg4[%c0_6, %c0_7] : memref<16x1xf32, #tpu.memory_space<vmem>>, vector<16x1xf32>
    %c0_8 = arith.constant 0 : index
    %c0_9 = arith.constant 0 : index
    %c0_10 = arith.constant 0 : index
    %8 = vector.load %arg8[%c0_8, %c0_9, %c0_10] : memref<1x6x32xf32, #tpu.memory_space<vmem>>, vector<1x6x32xf32>
    %9 = vector.shape_cast %8 : vector<1x6x32xf32> to vector<6x32xf32>
    %10 = vector.extract_strided_slice %9 {offsets = [0, 0], sizes = [1, 32], strides = [1, 1]} : vector<6x32xf32> to vector<1x32xf32>
    %11 = vector.extract_strided_slice %9 {offsets = [1, 0], sizes = [1, 32], strides = [1, 1]} : vector<6x32xf32> to vector<1x32xf32>
    %12 = vector.extract_strided_slice %9 {offsets = [2, 0], sizes = [1, 32], strides = [1, 1]} : vector<6x32xf32> to vector<1x32xf32>
    %13 = vector.extract_strided_slice %9 {offsets = [3, 0], sizes = [1, 32], strides = [1, 1]} : vector<6x32xf32> to vector<1x32xf32>
    %14 = vector.extract_strided_slice %9 {offsets = [4, 0], sizes = [1, 32], strides = [1, 1]} : vector<6x32xf32> to vector<1x32xf32>
    %15 = vector.extract_strided_slice %9 {offsets = [5, 0], sizes = [1, 32], strides = [1, 1]} : vector<6x32xf32> to vector<1x32xf32>
    %cst = arith.constant 1.600000e+01 : f32
    %16 = math.sqrt %cst : f32
    %cst_11 = arith.constant 1.000000e+00 : f32
    %17 = arith.divf %cst_11, %16 : f32
    %c0_12 = arith.constant 0 : index
    %c0_13 = arith.constant 0 : index
    %c0_14 = arith.constant 0 : index
    %18 = vector.load %arg5[%c0_12, %c0_13, %c0_14] : memref<1x32x96xbf16, #tpu.memory_space<vmem>>, vector<1x32x96xbf16>
    %19 = vector.shape_cast %18 : vector<1x32x96xbf16> to vector<32x96xbf16>
    %cst_15 = arith.constant dense<0.000000e+00> : vector<16x96xf32>
    %20 = tpu.matmul %5, %19, %cst_15 {dimension_numbers = #tpu.dot_dimension_numbers<[1], [0], [0], [1], [0, 0, 1, 1], [], []>} : vector<16x32xbf16>, vector<32x96xbf16>, vector<16x96xf32> -> vector<16x96xf32>
    %c0_16 = arith.constant 0 : index
    %c0_17 = arith.constant 0 : index
    %c0_18 = arith.constant 0 : index
    %21 = vector.load %arg6[%c0_16, %c0_17, %c0_18] : memref<1x1x96xf32, #tpu.memory_space<vmem>>, vector<1x1x96xf32>
    %22 = vector.shape_cast %21 : vector<1x1x96xf32> to vector<1x96xf32>
    %23 = vector.broadcast %22 : vector<1x96xf32> to vector<16x96xf32>
    %24 = arith.addf %20, %23 : vector<16x96xf32>
    %25 = vector.shape_cast %24 : vector<16x96xf32> to vector<2x8x96xf32>
    %c0_19 = arith.constant 0 : index
    %c0_20 = arith.constant 0 : index
    %c0_21 = arith.constant 0 : index
    %26 = vector.load %arg7[%c0_19, %c0_20, %c0_21] : memref<1x32x32xbf16, #tpu.memory_space<vmem>>, vector<1x32x32xbf16>
    %27 = vector.shape_cast %26 : vector<1x32x32xbf16> to vector<32x32xbf16>
    %cst_22 = arith.constant 0.000000e+00 : f32
    %28 = vector.broadcast %cst_22 : f32 to vector<16x32xf32>
    %29 = vector.extract_strided_slice %25 {offsets = [0, 0, 0], sizes = [2, 8, 16], strides = [1, 1, 1]} : vector<2x8x96xf32> to vector<2x8x16xf32>
    %30 = arith.truncf %29 : vector<2x8x16xf32> to vector<2x8x16xbf16>
    %31 = vector.extract_strided_slice %25 {offsets = [0, 0, 32], sizes = [2, 8, 16], strides = [1, 1, 1]} : vector<2x8x96xf32> to vector<2x8x16xf32>
    %32 = arith.truncf %31 : vector<2x8x16xf32> to vector<2x8x16xbf16>
    %33 = vector.extract_strided_slice %25 {offsets = [0, 0, 64], sizes = [2, 8, 16], strides = [1, 1, 1]} : vector<2x8x96xf32> to vector<2x8x16xf32>
    %34 = arith.truncf %33 : vector<2x8x16xf32> to vector<2x8x16xbf16>
    "tpu.trace_start"() <{level = 10 : i32, message = "bqd,bkd->bqk"}> : () -> ()
    %cst_23 = arith.constant dense<0.000000e+00> : vector<2x8x8xf32>
    %35 = tpu.matmul %30, %32, %cst_23 {dimension_numbers = #tpu.dot_dimension_numbers<[2], [2], [1], [1], [0, 0, 0, 1, 1, 1], [0], [0]>} : vector<2x8x16xbf16>, vector<2x8x16xbf16>, vector<2x8x8xf32> -> vector<2x8x8xf32>
    "tpu.trace_stop"() : () -> ()
    %36 = vector.broadcast %17 : f32 to vector<2x8x8xf32>
    %37 = arith.mulf %35, %36 : vector<2x8x8xf32>
    %38 = vector.broadcast %6 : vector<2x1x8xf32> to vector<2x8x8xf32>
    %39 = arith.addf %37, %38 : vector<2x8x8xf32>
    %cst_24 = arith.constant dense<0xFF800000> : vector<2x8xf32>
    %40 = vector.multi_reduction <maximumf>, %39, %cst_24 [2] : vector<2x8x8xf32> to vector<2x8xf32>
    %41 = vector.shape_cast %40 : vector<2x8xf32> to vector<2x8x1xf32>
    %42 = vector.broadcast %41 : vector<2x8x1xf32> to vector<2x8x8xf32>
    %43 = arith.subf %39, %42 : vector<2x8x8xf32>
    %44 = math.exp %43 : vector<2x8x8xf32>
    %cst_25 = arith.constant dense<0.000000e+00> : vector<2x8xf32>
    %45 = vector.multi_reduction <add>, %44, %cst_25 [2] : vector<2x8x8xf32> to vector<2x8xf32>
    %46 = vector.shape_cast %45 : vector<2x8xf32> to vector<2x8x1xf32>
    %47 = vector.broadcast %46 : vector<2x8x1xf32> to vector<2x8x8xf32>
    %48 = arith.divf %44, %47 : vector<2x8x8xf32>
    %49 = arith.truncf %48 : vector<2x8x8xf32> to vector<2x8x8xbf16>
    "tpu.trace_start"() <{level = 10 : i32, message = "bqk,bkd->bqd"}> : () -> ()
    %cst_26 = arith.constant dense<0.000000e+00> : vector<2x8x16xf32>
    %50 = tpu.matmul %49, %34, %cst_26 {dimension_numbers = #tpu.dot_dimension_numbers<[2], [1], [1], [2], [0, 0, 0, 1, 1, 2], [0], [0]>} : vector<2x8x8xbf16>, vector<2x8x16xbf16>, vector<2x8x16xf32> -> vector<2x8x16xf32>
    "tpu.trace_stop"() : () -> ()
    %51 = vector.shape_cast %50 : vector<2x8x16xf32> to vector<16x16xf32>
    %52 = arith.truncf %51 : vector<16x16xf32> to vector<16x16xbf16>
    %53 = vector.extract_strided_slice %27 {offsets = [0, 0], sizes = [16, 32], strides = [1, 1]} : vector<32x32xbf16> to vector<16x32xbf16>
    %cst_27 = arith.constant dense<0.000000e+00> : vector<16x32xf32>
    %54 = tpu.matmul %52, %53, %cst_27 {dimension_numbers = #tpu.dot_dimension_numbers<[1], [0], [0], [1], [0, 0, 1, 1], [], []>} : vector<16x16xbf16>, vector<16x32xbf16>, vector<16x32xf32> -> vector<16x32xf32>
    %55 = arith.addf %28, %54 : vector<16x32xf32>
    %56 = vector.extract_strided_slice %25 {offsets = [0, 0, 16], sizes = [2, 8, 16], strides = [1, 1, 1]} : vector<2x8x96xf32> to vector<2x8x16xf32>
    %57 = arith.truncf %56 : vector<2x8x16xf32> to vector<2x8x16xbf16>
    %58 = vector.extract_strided_slice %25 {offsets = [0, 0, 48], sizes = [2, 8, 16], strides = [1, 1, 1]} : vector<2x8x96xf32> to vector<2x8x16xf32>
    %59 = arith.truncf %58 : vector<2x8x16xf32> to vector<2x8x16xbf16>
    %60 = vector.extract_strided_slice %25 {offsets = [0, 0, 80], sizes = [2, 8, 16], strides = [1, 1, 1]} : vector<2x8x96xf32> to vector<2x8x16xf32>
    %61 = arith.truncf %60 : vector<2x8x16xf32> to vector<2x8x16xbf16>
    "tpu.trace_start"() <{level = 10 : i32, message = "bqd,bkd->bqk"}> : () -> ()
    %cst_28 = arith.constant dense<0.000000e+00> : vector<2x8x8xf32>
    %62 = tpu.matmul %57, %59, %cst_28 {dimension_numbers = #tpu.dot_dimension_numbers<[2], [2], [1], [1], [0, 0, 0, 1, 1, 1], [0], [0]>} : vector<2x8x16xbf16>, vector<2x8x16xbf16>, vector<2x8x8xf32> -> vector<2x8x8xf32>
    "tpu.trace_stop"() : () -> ()
    %63 = vector.broadcast %17 : f32 to vector<2x8x8xf32>
    %64 = arith.mulf %62, %63 : vector<2x8x8xf32>
    %65 = vector.broadcast %6 : vector<2x1x8xf32> to vector<2x8x8xf32>
    %66 = arith.addf %64, %65 : vector<2x8x8xf32>
    %cst_29 = arith.constant dense<0xFF800000> : vector<2x8xf32>
    %67 = vector.multi_reduction <maximumf>, %66, %cst_29 [2] : vector<2x8x8xf32> to vector<2x8xf32>
    %68 = vector.shape_cast %67 : vector<2x8xf32> to vector<2x8x1xf32>
    %69 = vector.broadcast %68 : vector<2x8x1xf32> to vector<2x8x8xf32>
    %70 = arith.subf %66, %69 : vector<2x8x8xf32>
    %71 = math.exp %70 : vector<2x8x8xf32>
    %cst_30 = arith.constant dense<0.000000e+00> : vector<2x8xf32>
    %72 = vector.multi_reduction <add>, %71, %cst_30 [2] : vector<2x8x8xf32> to vector<2x8xf32>
    %73 = vector.shape_cast %72 : vector<2x8xf32> to vector<2x8x1xf32>
    %74 = vector.broadcast %73 : vector<2x8x1xf32> to vector<2x8x8xf32>
    %75 = arith.divf %71, %74 : vector<2x8x8xf32>
    %76 = arith.truncf %75 : vector<2x8x8xf32> to vector<2x8x8xbf16>
    "tpu.trace_start"() <{level = 10 : i32, message = "bqk,bkd->bqd"}> : () -> ()
    %cst_31 = arith.constant dense<0.000000e+00> : vector<2x8x16xf32>
    %77 = tpu.matmul %76, %61, %cst_31 {dimension_numbers = #tpu.dot_dimension_numbers<[2], [1], [1], [2], [0, 0, 0, 1, 1, 2], [0], [0]>} : vector<2x8x8xbf16>, vector<2x8x16xbf16>, vector<2x8x16xf32> -> vector<2x8x16xf32>
    "tpu.trace_stop"() : () -> ()
    %78 = vector.shape_cast %77 : vector<2x8x16xf32> to vector<16x16xf32>
    %79 = arith.truncf %78 : vector<16x16xf32> to vector<16x16xbf16>
    %80 = vector.extract_strided_slice %27 {offsets = [16, 0], sizes = [16, 32], strides = [1, 1]} : vector<32x32xbf16> to vector<16x32xbf16>
    %cst_32 = arith.constant dense<0.000000e+00> : vector<16x32xf32>
    %81 = tpu.matmul %79, %80, %cst_32 {dimension_numbers = #tpu.dot_dimension_numbers<[1], [0], [0], [1], [0, 0, 1, 1], [], []>} : vector<16x16xbf16>, vector<16x32xbf16>, vector<16x32xf32> -> vector<16x32xf32>
    %82 = arith.addf %55, %81 : vector<16x32xf32>
    %83 = vector.broadcast %10 : vector<1x32xf32> to vector<16x32xf32>
    %84 = arith.addf %82, %83 : vector<16x32xf32>
    %85 = arith.addf %84, %4 : vector<16x32xf32>
    %cst_33 = arith.constant dense<0.000000e+00> : vector<16xf32>
    %86 = vector.multi_reduction <add>, %85, %cst_33 [1] : vector<16x32xf32> to vector<16xf32>
    %87 = vector.shape_cast %86 : vector<16xf32> to vector<16x1xf32>
    %cst_34 = arith.constant 3.200000e+01 : f32
    %88 = vector.broadcast %cst_34 : f32 to vector<16x1xf32>
    %89 = arith.divf %87, %88 : vector<16x1xf32>
    %90 = vector.broadcast %89 : vector<16x1xf32> to vector<16x32xf32>
    %91 = arith.subf %85, %90 : vector<16x32xf32>
    %92 = arith.mulf %91, %91 : vector<16x32xf32>
    %cst_35 = arith.constant dense<0.000000e+00> : vector<16xf32>
    %93 = vector.multi_reduction <add>, %92, %cst_35 [1] : vector<16x32xf32> to vector<16xf32>
    %94 = vector.shape_cast %93 : vector<16xf32> to vector<16x1xf32>
    %cst_36 = arith.constant 3.200000e+01 : f32
    %95 = vector.broadcast %cst_36 : f32 to vector<16x1xf32>
    %96 = arith.divf %94, %95 : vector<16x1xf32>
    %97 = vector.broadcast %89 : vector<16x1xf32> to vector<16x32xf32>
    %98 = arith.subf %85, %97 : vector<16x32xf32>
    %cst_37 = arith.constant 9.99999974E-6 : f32
    %99 = vector.broadcast %cst_37 : f32 to vector<16x1xf32>
    %100 = arith.addf %96, %99 : vector<16x1xf32>
    %101 = math.rsqrt %100 : vector<16x1xf32>
    %102 = vector.broadcast %101 : vector<16x1xf32> to vector<16x32xf32>
    %103 = arith.mulf %98, %102 : vector<16x32xf32>
    %104 = vector.broadcast %11 : vector<1x32xf32> to vector<16x32xf32>
    %105 = arith.mulf %103, %104 : vector<16x32xf32>
    %106 = vector.broadcast %12 : vector<1x32xf32> to vector<16x32xf32>
    %107 = arith.addf %105, %106 : vector<16x32xf32>
    %108 = vector.broadcast %7 : vector<16x1xf32> to vector<16x32xf32>
    %109 = arith.mulf %107, %108 : vector<16x32xf32>
    %110 = tpu.iota {dimensions = array<i32: 0>} : vector<16x1xi32>
    %c8_i32 = arith.constant 8 : i32
    %c0_i32_38 = arith.constant 0 : i32
    %111 = arith.cmpi eq, %c8_i32, %c0_i32_38 : i32
    %c1_i32 = arith.constant 1 : i32
    %112 = arith.select %111, %c1_i32, %c8_i32 : i32
    %113 = vector.broadcast %112 : i32 to vector<16x1xi32>
    %114 = arith.remsi %110, %113 : vector<16x1xi32>
    %c0_i32_39 = arith.constant 0 : i32
    %115 = vector.broadcast %c0_i32_39 : i32 to vector<16x1xi32>
    %116 = arith.cmpi ne, %114, %115 : vector<16x1xi32>
    %c0_i32_40 = arith.constant 0 : i32
    %117 = vector.broadcast %c0_i32_40 : i32 to vector<16x1xi32>
    %118 = arith.cmpi slt, %114, %117 : vector<16x1xi32>
    %c0_i32_41 = arith.constant 0 : i32
    %119 = arith.cmpi slt, %112, %c0_i32_41 : i32
    %120 = vector.broadcast %119 : i1 to vector<16x1xi1>
    %121 = vector.broadcast %120 : vector<16x1xi1> to vector<16x1xi1>
    %122 = arith.xori %118, %121 : vector<16x1xi1>
    %123 = arith.andi %122, %116 : vector<16x1xi1>
    %124 = vector.broadcast %112 : i32 to vector<16x1xi32>
    %125 = arith.addi %114, %124 : vector<16x1xi32>
    %126 = arith.select %123, %125, %114 : vector<16x1xi1>, vector<16x1xi32>
    %c0_42 = arith.constant 0 : index
    %c0_43 = arith.constant 0 : index
    %c0_44 = arith.constant 0 : index
    %127 = vector.load %arg9[%c0_42, %c0_43, %c0_44] : memref<1x288x64xbf16, #tpu.memory_space<vmem>>, vector<1x288x64xbf16>
    %128 = vector.shape_cast %127 : vector<1x288x64xbf16> to vector<288x64xbf16>
    %cst_45 = arith.constant 0.000000e+00 : f32
    %129 = vector.broadcast %cst_45 : f32 to vector<16x64xf32>
    %c4_i32 = arith.constant 4 : i32
    %130 = tpu.dynamic_rotate %109 by %c4_i32 dim 0 : vector<16x32xf32>, i32 -> vector<16x32xf32>
    %c-4_i32 = arith.constant -4 : i32
    %131 = vector.broadcast %c-4_i32 : i32 to vector<16x1xi32>
    %132 = arith.addi %126, %131 : vector<16x1xi32>
    %c0_i32_46 = arith.constant 0 : i32
    %133 = vector.broadcast %c0_i32_46 : i32 to vector<16x1xi32>
    %134 = arith.cmpi sge, %132, %133 : vector<16x1xi32>
    %c-4_i32_47 = arith.constant -4 : i32
    %135 = vector.broadcast %c-4_i32_47 : i32 to vector<16x1xi32>
    %136 = arith.addi %126, %135 : vector<16x1xi32>
    %c8_i32_48 = arith.constant 8 : i32
    %137 = vector.broadcast %c8_i32_48 : i32 to vector<16x1xi32>
    %138 = arith.cmpi slt, %136, %137 : vector<16x1xi32>
    %139 = arith.andi %134, %138 : vector<16x1xi1>
    %cst_49 = arith.constant 0.000000e+00 : f32
    %140 = vector.shape_cast %139 : vector<16x1xi1> to vector<16x1xi1>
    %141 = vector.broadcast %140 : vector<16x1xi1> to vector<16x32xi1>
    %142 = vector.broadcast %cst_49 : f32 to vector<16x32xf32>
    %143 = arith.select %141, %130, %142 : vector<16x32xi1>, vector<16x32xf32>
    %144 = arith.truncf %143 : vector<16x32xf32> to vector<16x32xbf16>
    %145 = vector.extract_strided_slice %128 {offsets = [0, 0], sizes = [32, 64], strides = [1, 1]} : vector<288x64xbf16> to vector<32x64xbf16>
    %cst_50 = arith.constant dense<0.000000e+00> : vector<16x64xf32>
    %146 = tpu.matmul %144, %145, %cst_50 {dimension_numbers = #tpu.dot_dimension_numbers<[1], [0], [0], [1], [0, 0, 1, 1], [], []>} : vector<16x32xbf16>, vector<32x64xbf16>, vector<16x64xf32> -> vector<16x64xf32>
    %147 = arith.addf %129, %146 : vector<16x64xf32>
    %c3_i32 = arith.constant 3 : i32
    %148 = tpu.dynamic_rotate %109 by %c3_i32 dim 0 : vector<16x32xf32>, i32 -> vector<16x32xf32>
    %c-3_i32 = arith.constant -3 : i32
    %149 = vector.broadcast %c-3_i32 : i32 to vector<16x1xi32>
    %150 = arith.addi %126, %149 : vector<16x1xi32>
    %c0_i32_51 = arith.constant 0 : i32
    %151 = vector.broadcast %c0_i32_51 : i32 to vector<16x1xi32>
    %152 = arith.cmpi sge, %150, %151 : vector<16x1xi32>
    %c-3_i32_52 = arith.constant -3 : i32
    %153 = vector.broadcast %c-3_i32_52 : i32 to vector<16x1xi32>
    %154 = arith.addi %126, %153 : vector<16x1xi32>
    %c8_i32_53 = arith.constant 8 : i32
    %155 = vector.broadcast %c8_i32_53 : i32 to vector<16x1xi32>
    %156 = arith.cmpi slt, %154, %155 : vector<16x1xi32>
    %157 = arith.andi %152, %156 : vector<16x1xi1>
    %cst_54 = arith.constant 0.000000e+00 : f32
    %158 = vector.shape_cast %157 : vector<16x1xi1> to vector<16x1xi1>
    %159 = vector.broadcast %158 : vector<16x1xi1> to vector<16x32xi1>
    %160 = vector.broadcast %cst_54 : f32 to vector<16x32xf32>
    %161 = arith.select %159, %148, %160 : vector<16x32xi1>, vector<16x32xf32>
    %162 = arith.truncf %161 : vector<16x32xf32> to vector<16x32xbf16>
    %163 = vector.extract_strided_slice %128 {offsets = [32, 0], sizes = [32, 64], strides = [1, 1]} : vector<288x64xbf16> to vector<32x64xbf16>
    %cst_55 = arith.constant dense<0.000000e+00> : vector<16x64xf32>
    %164 = tpu.matmul %162, %163, %cst_55 {dimension_numbers = #tpu.dot_dimension_numbers<[1], [0], [0], [1], [0, 0, 1, 1], [], []>} : vector<16x32xbf16>, vector<32x64xbf16>, vector<16x64xf32> -> vector<16x64xf32>
    %165 = arith.addf %147, %164 : vector<16x64xf32>
    %c2_i32 = arith.constant 2 : i32
    %166 = tpu.dynamic_rotate %109 by %c2_i32 dim 0 : vector<16x32xf32>, i32 -> vector<16x32xf32>
    %c-2_i32 = arith.constant -2 : i32
    %167 = vector.broadcast %c-2_i32 : i32 to vector<16x1xi32>
    %168 = arith.addi %126, %167 : vector<16x1xi32>
    %c0_i32_56 = arith.constant 0 : i32
    %169 = vector.broadcast %c0_i32_56 : i32 to vector<16x1xi32>
    %170 = arith.cmpi sge, %168, %169 : vector<16x1xi32>
    %c-2_i32_57 = arith.constant -2 : i32
    %171 = vector.broadcast %c-2_i32_57 : i32 to vector<16x1xi32>
    %172 = arith.addi %126, %171 : vector<16x1xi32>
    %c8_i32_58 = arith.constant 8 : i32
    %173 = vector.broadcast %c8_i32_58 : i32 to vector<16x1xi32>
    %174 = arith.cmpi slt, %172, %173 : vector<16x1xi32>
    %175 = arith.andi %170, %174 : vector<16x1xi1>
    %cst_59 = arith.constant 0.000000e+00 : f32
    %176 = vector.shape_cast %175 : vector<16x1xi1> to vector<16x1xi1>
    %177 = vector.broadcast %176 : vector<16x1xi1> to vector<16x32xi1>
    %178 = vector.broadcast %cst_59 : f32 to vector<16x32xf32>
    %179 = arith.select %177, %166, %178 : vector<16x32xi1>, vector<16x32xf32>
    %180 = arith.truncf %179 : vector<16x32xf32> to vector<16x32xbf16>
    %181 = vector.extract_strided_slice %128 {offsets = [64, 0], sizes = [32, 64], strides = [1, 1]} : vector<288x64xbf16> to vector<32x64xbf16>
    %cst_60 = arith.constant dense<0.000000e+00> : vector<16x64xf32>
    %182 = tpu.matmul %180, %181, %cst_60 {dimension_numbers = #tpu.dot_dimension_numbers<[1], [0], [0], [1], [0, 0, 1, 1], [], []>} : vector<16x32xbf16>, vector<32x64xbf16>, vector<16x64xf32> -> vector<16x64xf32>
    %183 = arith.addf %165, %182 : vector<16x64xf32>
    %c1_i32_61 = arith.constant 1 : i32
    %184 = tpu.dynamic_rotate %109 by %c1_i32_61 dim 0 : vector<16x32xf32>, i32 -> vector<16x32xf32>
    %c-1_i32 = arith.constant -1 : i32
    %185 = vector.broadcast %c-1_i32 : i32 to vector<16x1xi32>
    %186 = arith.addi %126, %185 : vector<16x1xi32>
    %c0_i32_62 = arith.constant 0 : i32
    %187 = vector.broadcast %c0_i32_62 : i32 to vector<16x1xi32>
    %188 = arith.cmpi sge, %186, %187 : vector<16x1xi32>
    %c-1_i32_63 = arith.constant -1 : i32
    %189 = vector.broadcast %c-1_i32_63 : i32 to vector<16x1xi32>
    %190 = arith.addi %126, %189 : vector<16x1xi32>
    %c8_i32_64 = arith.constant 8 : i32
    %191 = vector.broadcast %c8_i32_64 : i32 to vector<16x1xi32>
    %192 = arith.cmpi slt, %190, %191 : vector<16x1xi32>
    %193 = arith.andi %188, %192 : vector<16x1xi1>
    %cst_65 = arith.constant 0.000000e+00 : f32
    %194 = vector.shape_cast %193 : vector<16x1xi1> to vector<16x1xi1>
    %195 = vector.broadcast %194 : vector<16x1xi1> to vector<16x32xi1>
    %196 = vector.broadcast %cst_65 : f32 to vector<16x32xf32>
    %197 = arith.select %195, %184, %196 : vector<16x32xi1>, vector<16x32xf32>
    %198 = arith.truncf %197 : vector<16x32xf32> to vector<16x32xbf16>
    %199 = vector.extract_strided_slice %128 {offsets = [96, 0], sizes = [32, 64], strides = [1, 1]} : vector<288x64xbf16> to vector<32x64xbf16>
    %cst_66 = arith.constant dense<0.000000e+00> : vector<16x64xf32>
    %200 = tpu.matmul %198, %199, %cst_66 {dimension_numbers = #tpu.dot_dimension_numbers<[1], [0], [0], [1], [0, 0, 1, 1], [], []>} : vector<16x32xbf16>, vector<32x64xbf16>, vector<16x64xf32> -> vector<16x64xf32>
    %201 = arith.addf %183, %200 : vector<16x64xf32>
    %c0_i32_67 = arith.constant 0 : i32
    %202 = tpu.dynamic_rotate %109 by %c0_i32_67 dim 0 : vector<16x32xf32>, i32 -> vector<16x32xf32>
    %c0_i32_68 = arith.constant 0 : i32
    %203 = vector.broadcast %c0_i32_68 : i32 to vector<16x1xi32>
    %204 = arith.addi %126, %203 : vector<16x1xi32>
    %c0_i32_69 = arith.constant 0 : i32
    %205 = vector.broadcast %c0_i32_69 : i32 to vector<16x1xi32>
    %206 = arith.cmpi sge, %204, %205 : vector<16x1xi32>
    %c0_i32_70 = arith.constant 0 : i32
    %207 = vector.broadcast %c0_i32_70 : i32 to vector<16x1xi32>
    %208 = arith.addi %126, %207 : vector<16x1xi32>
    %c8_i32_71 = arith.constant 8 : i32
    %209 = vector.broadcast %c8_i32_71 : i32 to vector<16x1xi32>
    %210 = arith.cmpi slt, %208, %209 : vector<16x1xi32>
    %211 = arith.andi %206, %210 : vector<16x1xi1>
    %cst_72 = arith.constant 0.000000e+00 : f32
    %212 = vector.shape_cast %211 : vector<16x1xi1> to vector<16x1xi1>
    %213 = vector.broadcast %212 : vector<16x1xi1> to vector<16x32xi1>
    %214 = vector.broadcast %cst_72 : f32 to vector<16x32xf32>
    %215 = arith.select %213, %202, %214 : vector<16x32xi1>, vector<16x32xf32>
    %216 = arith.truncf %215 : vector<16x32xf32> to vector<16x32xbf16>
    %217 = vector.extract_strided_slice %128 {offsets = [128, 0], sizes = [32, 64], strides = [1, 1]} : vector<288x64xbf16> to vector<32x64xbf16>
    %cst_73 = arith.constant dense<0.000000e+00> : vector<16x64xf32>
    %218 = tpu.matmul %216, %217, %cst_73 {dimension_numbers = #tpu.dot_dimension_numbers<[1], [0], [0], [1], [0, 0, 1, 1], [], []>} : vector<16x32xbf16>, vector<32x64xbf16>, vector<16x64xf32> -> vector<16x64xf32>
    %219 = arith.addf %201, %218 : vector<16x64xf32>
    %c15_i32 = arith.constant 15 : i32
    %220 = tpu.dynamic_rotate %109 by %c15_i32 dim 0 : vector<16x32xf32>, i32 -> vector<16x32xf32>
    %c1_i32_74 = arith.constant 1 : i32
    %221 = vector.broadcast %c1_i32_74 : i32 to vector<16x1xi32>
    %222 = arith.addi %126, %221 : vector<16x1xi32>
    %c0_i32_75 = arith.constant 0 : i32
    %223 = vector.broadcast %c0_i32_75 : i32 to vector<16x1xi32>
    %224 = arith.cmpi sge, %222, %223 : vector<16x1xi32>
    %c1_i32_76 = arith.constant 1 : i32
    %225 = vector.broadcast %c1_i32_76 : i32 to vector<16x1xi32>
    %226 = arith.addi %126, %225 : vector<16x1xi32>
    %c8_i32_77 = arith.constant 8 : i32
    %227 = vector.broadcast %c8_i32_77 : i32 to vector<16x1xi32>
    %228 = arith.cmpi slt, %226, %227 : vector<16x1xi32>
    %229 = arith.andi %224, %228 : vector<16x1xi1>
    %cst_78 = arith.constant 0.000000e+00 : f32
    %230 = vector.shape_cast %229 : vector<16x1xi1> to vector<16x1xi1>
    %231 = vector.broadcast %230 : vector<16x1xi1> to vector<16x32xi1>
    %232 = vector.broadcast %cst_78 : f32 to vector<16x32xf32>
    %233 = arith.select %231, %220, %232 : vector<16x32xi1>, vector<16x32xf32>
    %234 = arith.truncf %233 : vector<16x32xf32> to vector<16x32xbf16>
    %235 = vector.extract_strided_slice %128 {offsets = [160, 0], sizes = [32, 64], strides = [1, 1]} : vector<288x64xbf16> to vector<32x64xbf16>
    %cst_79 = arith.constant dense<0.000000e+00> : vector<16x64xf32>
    %236 = tpu.matmul %234, %235, %cst_79 {dimension_numbers = #tpu.dot_dimension_numbers<[1], [0], [0], [1], [0, 0, 1, 1], [], []>} : vector<16x32xbf16>, vector<32x64xbf16>, vector<16x64xf32> -> vector<16x64xf32>
    %237 = arith.addf %219, %236 : vector<16x64xf32>
    %c14_i32 = arith.constant 14 : i32
    %238 = tpu.dynamic_rotate %109 by %c14_i32 dim 0 : vector<16x32xf32>, i32 -> vector<16x32xf32>
    %c2_i32_80 = arith.constant 2 : i32
    %239 = vector.broadcast %c2_i32_80 : i32 to vector<16x1xi32>
    %240 = arith.addi %126, %239 : vector<16x1xi32>
    %c0_i32_81 = arith.constant 0 : i32
    %241 = vector.broadcast %c0_i32_81 : i32 to vector<16x1xi32>
    %242 = arith.cmpi sge, %240, %241 : vector<16x1xi32>
    %c2_i32_82 = arith.constant 2 : i32
    %243 = vector.broadcast %c2_i32_82 : i32 to vector<16x1xi32>
    %244 = arith.addi %126, %243 : vector<16x1xi32>
    %c8_i32_83 = arith.constant 8 : i32
    %245 = vector.broadcast %c8_i32_83 : i32 to vector<16x1xi32>
    %246 = arith.cmpi slt, %244, %245 : vector<16x1xi32>
    %247 = arith.andi %242, %246 : vector<16x1xi1>
    %cst_84 = arith.constant 0.000000e+00 : f32
    %248 = vector.shape_cast %247 : vector<16x1xi1> to vector<16x1xi1>
    %249 = vector.broadcast %248 : vector<16x1xi1> to vector<16x32xi1>
    %250 = vector.broadcast %cst_84 : f32 to vector<16x32xf32>
    %251 = arith.select %249, %238, %250 : vector<16x32xi1>, vector<16x32xf32>
    %252 = arith.truncf %251 : vector<16x32xf32> to vector<16x32xbf16>
    %253 = vector.extract_strided_slice %128 {offsets = [192, 0], sizes = [32, 64], strides = [1, 1]} : vector<288x64xbf16> to vector<32x64xbf16>
    %cst_85 = arith.constant dense<0.000000e+00> : vector<16x64xf32>
    %254 = tpu.matmul %252, %253, %cst_85 {dimension_numbers = #tpu.dot_dimension_numbers<[1], [0], [0], [1], [0, 0, 1, 1], [], []>} : vector<16x32xbf16>, vector<32x64xbf16>, vector<16x64xf32> -> vector<16x64xf32>
    %255 = arith.addf %237, %254 : vector<16x64xf32>
    %c13_i32 = arith.constant 13 : i32
    %256 = tpu.dynamic_rotate %109 by %c13_i32 dim 0 : vector<16x32xf32>, i32 -> vector<16x32xf32>
    %c3_i32_86 = arith.constant 3 : i32
    %257 = vector.broadcast %c3_i32_86 : i32 to vector<16x1xi32>
    %258 = arith.addi %126, %257 : vector<16x1xi32>
    %c0_i32_87 = arith.constant 0 : i32
    %259 = vector.broadcast %c0_i32_87 : i32 to vector<16x1xi32>
    %260 = arith.cmpi sge, %258, %259 : vector<16x1xi32>
    %c3_i32_88 = arith.constant 3 : i32
    %261 = vector.broadcast %c3_i32_88 : i32 to vector<16x1xi32>
    %262 = arith.addi %126, %261 : vector<16x1xi32>
    %c8_i32_89 = arith.constant 8 : i32
    %263 = vector.broadcast %c8_i32_89 : i32 to vector<16x1xi32>
    %264 = arith.cmpi slt, %262, %263 : vector<16x1xi32>
    %265 = arith.andi %260, %264 : vector<16x1xi1>
    %cst_90 = arith.constant 0.000000e+00 : f32
    %266 = vector.shape_cast %265 : vector<16x1xi1> to vector<16x1xi1>
    %267 = vector.broadcast %266 : vector<16x1xi1> to vector<16x32xi1>
    %268 = vector.broadcast %cst_90 : f32 to vector<16x32xf32>
    %269 = arith.select %267, %256, %268 : vector<16x32xi1>, vector<16x32xf32>
    %270 = arith.truncf %269 : vector<16x32xf32> to vector<16x32xbf16>
    %271 = vector.extract_strided_slice %128 {offsets = [224, 0], sizes = [32, 64], strides = [1, 1]} : vector<288x64xbf16> to vector<32x64xbf16>
    %cst_91 = arith.constant dense<0.000000e+00> : vector<16x64xf32>
    %272 = tpu.matmul %270, %271, %cst_91 {dimension_numbers = #tpu.dot_dimension_numbers<[1], [0], [0], [1], [0, 0, 1, 1], [], []>} : vector<16x32xbf16>, vector<32x64xbf16>, vector<16x64xf32> -> vector<16x64xf32>
    %273 = arith.addf %255, %272 : vector<16x64xf32>
    %c12_i32 = arith.constant 12 : i32
    %274 = tpu.dynamic_rotate %109 by %c12_i32 dim 0 : vector<16x32xf32>, i32 -> vector<16x32xf32>
    %c4_i32_92 = arith.constant 4 : i32
    %275 = vector.broadcast %c4_i32_92 : i32 to vector<16x1xi32>
    %276 = arith.addi %126, %275 : vector<16x1xi32>
    %c0_i32_93 = arith.constant 0 : i32
    %277 = vector.broadcast %c0_i32_93 : i32 to vector<16x1xi32>
    %278 = arith.cmpi sge, %276, %277 : vector<16x1xi32>
    %c4_i32_94 = arith.constant 4 : i32
    %279 = vector.broadcast %c4_i32_94 : i32 to vector<16x1xi32>
    %280 = arith.addi %126, %279 : vector<16x1xi32>
    %c8_i32_95 = arith.constant 8 : i32
    %281 = vector.broadcast %c8_i32_95 : i32 to vector<16x1xi32>
    %282 = arith.cmpi slt, %280, %281 : vector<16x1xi32>
    %283 = arith.andi %278, %282 : vector<16x1xi1>
    %cst_96 = arith.constant 0.000000e+00 : f32
    %284 = vector.shape_cast %283 : vector<16x1xi1> to vector<16x1xi1>
    %285 = vector.broadcast %284 : vector<16x1xi1> to vector<16x32xi1>
    %286 = vector.broadcast %cst_96 : f32 to vector<16x32xf32>
    %287 = arith.select %285, %274, %286 : vector<16x32xi1>, vector<16x32xf32>
    %288 = arith.truncf %287 : vector<16x32xf32> to vector<16x32xbf16>
    %289 = vector.extract_strided_slice %128 {offsets = [256, 0], sizes = [32, 64], strides = [1, 1]} : vector<288x64xbf16> to vector<32x64xbf16>
    %cst_97 = arith.constant dense<0.000000e+00> : vector<16x64xf32>
    %290 = tpu.matmul %288, %289, %cst_97 {dimension_numbers = #tpu.dot_dimension_numbers<[1], [0], [0], [1], [0, 0, 1, 1], [], []>} : vector<16x32xbf16>, vector<32x64xbf16>, vector<16x64xf32> -> vector<16x64xf32>
    %291 = arith.addf %273, %290 : vector<16x64xf32>
    %c0_98 = arith.constant 0 : index
    %c0_99 = arith.constant 0 : index
    %c0_100 = arith.constant 0 : index
    %292 = vector.load %arg10[%c0_98, %c0_99, %c0_100] : memref<1x1x64xf32, #tpu.memory_space<vmem>>, vector<1x1x64xf32>
    %293 = vector.shape_cast %292 : vector<1x1x64xf32> to vector<1x64xf32>
    %294 = vector.broadcast %293 : vector<1x64xf32> to vector<16x64xf32>
    %295 = arith.addf %291, %294 : vector<16x64xf32>
    %cst_101 = arith.constant 0.000000e+00 : f32
    %296 = vector.broadcast %cst_101 : f32 to vector<16x64xf32>
    %297 = arith.maximumf %295, %296 : vector<16x64xf32>
    %298 = arith.truncf %297 : vector<16x64xf32> to vector<16x64xbf16>
    %c0_102 = arith.constant 0 : index
    %c0_103 = arith.constant 0 : index
    %c0_104 = arith.constant 0 : index
    %299 = vector.load %arg11[%c0_102, %c0_103, %c0_104] : memref<1x64x32xbf16, #tpu.memory_space<vmem>>, vector<1x64x32xbf16>
    %300 = vector.shape_cast %299 : vector<1x64x32xbf16> to vector<64x32xbf16>
    %cst_105 = arith.constant dense<0.000000e+00> : vector<16x32xf32>
    %301 = tpu.matmul %298, %300, %cst_105 {dimension_numbers = #tpu.dot_dimension_numbers<[1], [0], [0], [1], [0, 0, 1, 1], [], []>} : vector<16x64xbf16>, vector<64x32xbf16>, vector<16x32xf32> -> vector<16x32xf32>
    %302 = vector.broadcast %13 : vector<1x32xf32> to vector<16x32xf32>
    %303 = arith.addf %301, %302 : vector<16x32xf32>
    %304 = arith.addf %303, %109 : vector<16x32xf32>
    %cst_106 = arith.constant dense<0.000000e+00> : vector<16xf32>
    %305 = vector.multi_reduction <add>, %304, %cst_106 [1] : vector<16x32xf32> to vector<16xf32>
    %306 = vector.shape_cast %305 : vector<16xf32> to vector<16x1xf32>
    %cst_107 = arith.constant 3.200000e+01 : f32
    %307 = vector.broadcast %cst_107 : f32 to vector<16x1xf32>
    %308 = arith.divf %306, %307 : vector<16x1xf32>
    %309 = vector.broadcast %308 : vector<16x1xf32> to vector<16x32xf32>
    %310 = arith.subf %304, %309 : vector<16x32xf32>
    %311 = arith.mulf %310, %310 : vector<16x32xf32>
    %cst_108 = arith.constant dense<0.000000e+00> : vector<16xf32>
    %312 = vector.multi_reduction <add>, %311, %cst_108 [1] : vector<16x32xf32> to vector<16xf32>
    %313 = vector.shape_cast %312 : vector<16xf32> to vector<16x1xf32>
    %cst_109 = arith.constant 3.200000e+01 : f32
    %314 = vector.broadcast %cst_109 : f32 to vector<16x1xf32>
    %315 = arith.divf %313, %314 : vector<16x1xf32>
    %316 = vector.broadcast %308 : vector<16x1xf32> to vector<16x32xf32>
    %317 = arith.subf %304, %316 : vector<16x32xf32>
    %cst_110 = arith.constant 9.99999974E-6 : f32
    %318 = vector.broadcast %cst_110 : f32 to vector<16x1xf32>
    %319 = arith.addf %315, %318 : vector<16x1xf32>
    %320 = math.rsqrt %319 : vector<16x1xf32>
    %321 = vector.broadcast %320 : vector<16x1xf32> to vector<16x32xf32>
    %322 = arith.mulf %317, %321 : vector<16x32xf32>
    %323 = vector.broadcast %14 : vector<1x32xf32> to vector<16x32xf32>
    %324 = arith.mulf %322, %323 : vector<16x32xf32>
    %325 = vector.broadcast %15 : vector<1x32xf32> to vector<16x32xf32>
    %326 = arith.addf %324, %325 : vector<16x32xf32>
    %327 = vector.broadcast %7 : vector<16x1xf32> to vector<16x32xf32>
    %328 = arith.mulf %326, %327 : vector<16x32xf32>
    %329 = vector.shape_cast %328 : vector<16x32xf32> to vector<2x8x32xf32>
    %c0_111 = arith.constant 0 : index
    %c0_112 = arith.constant 0 : index
    %c0_113 = arith.constant 0 : index
    %330 = vector.load %arg12[%c0_111, %c0_112, %c0_113] : memref<2x8x32xf32, #tpu.memory_space<vmem>>, vector<2x8x32xf32>
    tpu.vector_store %arg12[%c0_111, %c0_112, %c0_113], %329 {strides = array<i32>} : memref<2x8x32xf32, #tpu.memory_space<vmem>>, vector<2x8x32xf32>,
    return
  }
  func.func @transform_0(%arg0: i32, %arg1: i32) -> (i32, i32, i32) {
    %c0_i32 = arith.constant 0 : i32
    %c0_i32_0 = arith.constant 0 : i32
    %c0_i32_1 = arith.constant 0 : i32
    return %arg0, %c0_i32, %c0_i32_0 : i32, i32, i32
  }
  func.func @transform_1(%arg0: i32, %arg1: i32) -> (i32, i32, i32) {
    %c0_i32 = arith.constant 0 : i32
    %c0_i32_0 = arith.constant 0 : i32
    %c0_i32_1 = arith.constant 0 : i32
    return %arg0, %c0_i32, %c0_i32_0 : i32, i32, i32
  }
  func.func @transform_2(%arg0: i32, %arg1: i32) -> (i32, i32) {
    %c0_i32 = arith.constant 0 : i32
    %c0_i32_0 = arith.constant 0 : i32
    return %arg0, %c0_i32 : i32, i32
  }
  func.func @transform_3(%arg0: i32, %arg1: i32) -> (i32, i32, i32) {
    %c0_i32 = arith.constant 0 : i32
    %c0_i32_0 = arith.constant 0 : i32
    %c0_i32_1 = arith.constant 0 : i32
    return %arg1, %c0_i32, %c0_i32_0 : i32, i32, i32
  }
  func.func @transform_4(%arg0: i32, %arg1: i32) -> (i32, i32, i32) {
    %c0_i32 = arith.constant 0 : i32
    %c0_i32_0 = arith.constant 0 : i32
    %c0_i32_1 = arith.constant 0 : i32
    return %arg1, %c0_i32, %c0_i32_0 : i32, i32, i32
  }
  func.func @transform_5(%arg0: i32, %arg1: i32) -> (i32, i32, i32) {
    %c0_i32 = arith.constant 0 : i32
    %c0_i32_0 = arith.constant 0 : i32
    %c0_i32_1 = arith.constant 0 : i32
    return %arg1, %c0_i32, %c0_i32_0 : i32, i32, i32
  }
  func.func @transform_6(%arg0: i32, %arg1: i32) -> (i32, i32, i32) {
    %c0_i32 = arith.constant 0 : i32
    %c0_i32_0 = arith.constant 0 : i32
    %c0_i32_1 = arith.constant 0 : i32
    return %arg1, %c0_i32, %c0_i32_0 : i32, i32, i32
  }
  func.func @transform_7(%arg0: i32, %arg1: i32) -> (i32, i32, i32) {
    %c0_i32 = arith.constant 0 : i32
    %c0_i32_0 = arith.constant 0 : i32
    %c0_i32_1 = arith.constant 0 : i32
    return %arg1, %c0_i32, %c0_i32_0 : i32, i32, i32
  }
  func.func @transform_8(%arg0: i32, %arg1: i32) -> (i32, i32, i32) {
    %c0_i32 = arith.constant 0 : i32
    %c0_i32_0 = arith.constant 0 : i32
    %c0_i32_1 = arith.constant 0 : i32
    return %arg1, %c0_i32, %c0_i32_0 : i32, i32, i32
  }
  func.func @transform_9(%arg0: i32, %arg1: i32) -> (i32, i32, i32) {
    %c0_i32 = arith.constant 0 : i32
    %c0_i32_0 = arith.constant 0 : i32
    %c0_i32_1 = arith.constant 0 : i32
    return %arg1, %c0_i32, %c0_i32_0 : i32, i32, i32
  }
  func.func @transform_10(%arg0: i32, %arg1: i32) -> (i32, i32, i32) {
    %c0_i32 = arith.constant 0 : i32
    %c0_i32_0 = arith.constant 0 : i32
    %c0_i32_1 = arith.constant 0 : i32
    return %arg0, %c0_i32, %c0_i32_0 : i32, i32, i32
  }
}

</mosaic_0001>

<llo_original>
// kernel: _lambda_.1
$region0: #{_lambda_.1}
  #allocation0 [shape = 'u32[]', space=smem, size = 0x4, offset = 0x4, fixed_abs, tag = 'smem constant byte address 0x4 - core index']
  #allocation1 [shape = 'u32[144,128]{1,0:T(1,128)}', space=vmem, size = 0x12000, scoped, tag = 'internal scratch']
  %s0 = inlined_call_operand.hbm [shape: f32[2,8,32], index: 0, kind: input, shape index: {}]
  %s1 = inlined_call_operand.hbm [shape: f32[2,1,8], index: 1, kind: input, shape index: {}]
  %s2 = inlined_call_operand.hbm [shape: f32[16,1], index: 2, kind: input, shape index: {}]
  %s3 = inlined_call_operand.hbm [shape: bf16[2,32,96], index: 3, kind: input, shape index: {}]
  %s4 = inlined_call_operand.hbm [shape: f32[2,1,96], index: 4, kind: input, shape index: {}]
  %s5 = inlined_call_operand.hbm [shape: bf16[2,32,32], index: 5, kind: input, shape index: {}]
  %s6 = inlined_call_operand.hbm [shape: f32[2,6,32], index: 6, kind: input, shape index: {}]
  %s7 = inlined_call_operand.hbm [shape: bf16[2,288,64], index: 7, kind: input, shape index: {}]
  %s8 = inlined_call_operand.hbm [shape: f32[2,1,64], index: 8, kind: input, shape index: {}]
  %s9 = inlined_call_operand.hbm [shape: bf16[2,64,32], index: 9, kind: input, shape index: {}]
  %s10 = inlined_call_operand.hbm [shape: f32[2,8,32], index: 10, kind: output, shape index: {}]
  %s11 = sld [smem:[#allocation0]]
  $region117: #{_lambda_.1} parent=0
    _
  %s13 = ssub.s32 1, %s11
  %s14 = scalar_select 0, %s13, %s11
  $region1: #{_lambda_.1} parent=0
    #allocation2 [shape = 'u8[8192]{0}', space=vmem, size = 0x2000, scoped, tag = 'input window, operand 0, single buffered']
    #allocation3 [shape = 's32[2]{0}', space=sflag, size = 0x8, scoped, tag = 'scoped memory for _lambda_.1']
    #allocation4 [shape = 's32[2]{0}', space=sflag, size = 0x8, scoped, tag = 'scoped memory for _lambda_.1']
    #allocation5 [shape = 'u8[1024]{0}', space=vmem, size = 0x400, scoped, tag = 'input window, operand 1, single buffered']
    #allocation6 [shape = 's32[1]{0}', space=sflag, size = 0x4, scoped, tag = 'scoped memory for _lambda_.1']
    #allocation7 [shape = 'u8[8192]{0}', space=vmem, size = 0x2000, scoped, tag = 'input window, operand 2, single buffered']
    #allocation8 [shape = 'u8[16384]{0}', space=vmem, size = 0x4000, scoped, tag = 'input window, operand 3']
    #allocation9 [shape = 's32[2]{0}', space=sflag, size = 0x8, scoped, tag = 'scoped memory for _lambda_.1']
    #allocation10 [shape = 'u8[1024]{0}', space=vmem, size = 0x400, scoped, tag = 'input window, operand 4']
    #allocation11 [shape = 'u8[16384]{0}', space=vmem, size = 0x4000, scoped, tag = 'input window, operand 5']
    #allocation12 [shape = 's32[2]{0}', space=sflag, size = 0x8, scoped, tag = 'scoped memory for _lambda_.1']
    #allocation13 [shape = 'u8[8192]{0}', space=vmem, size = 0x2000, scoped, tag = 'input window, operand 6']
    #allocation14 [shape = 'u8[147456]{0}', space=vmem, size = 0x24000, scoped, tag = 'input window, operand 7']
    #allocation15 [shape = 's32[2]{0}', space=sflag, size = 0x8, scoped, tag = 'scoped memory for _lambda_.1']
    #allocation16 [shape = 'u8[1024]{0}', space=vmem, size = 0x400, scoped, tag = 'input window, operand 8']
    #allocation17 [shape = 'u8[32768]{0}', space=vmem, size = 0x8000, scoped, tag = 'input window, operand 9']
    #allocation18 [shape = 's32[2]{0}', space=sflag, size = 0x8, scoped, tag = 'scoped memory for _lambda_.1']
    #allocation19 [shape = 'u8[8192]{0}', space=vmem, size = 0x2000, scoped, tag = 'output window, operand 0, single buffered']
    %15 = vsyncpa [#allocation3], 0
    %16 = vsyncpa [#allocation6], 0
    %17 = vsyncpa [#allocation9], 0
    %s18 = scalar_lea.sflag [#allocation9], 1
    %19 = vsyncpa %s18, 0
    %20 = vsyncpa [#allocation12], 0
    %s21 = scalar_lea.sflag [#allocation12], 1
    %22 = vsyncpa %s21, 0
    %23 = vsyncpa [#allocation15], 0
    %s24 = scalar_lea.sflag [#allocation15], 1
    %25 = vsyncpa %s24, 0
    %26 = vsyncpa [#allocation18], 0
    %s27 = scalar_lea.sflag [#allocation18], 1
    %28 = vsyncpa %s27, 0
    %29 = vsyncpa [#allocation4], 0
    loop: start=0, step=1, limit=4
    $region2: #{_lambda_.1} parent=1 // loop_pre_header
      _
    $region3: #{_lambda_.1} parent=1 // loop_header
      %s31 = sphi 0, %s35
      %p32 = scmp.ge.s32.totalorder %s31, 4
      %s38 = sphi 0, %s50
      %s39 = sphi 0, %s46
      %s40 = sphi 0, %s38
      %s41 = sphi 0, %s39
      %s42 = sphi 0, %s40
      %s43 = sphi 0, %s41
      %s53 = sphi 0, %s55
      %s56 = sphi 0, %s53
      %s57 = sphi 0, %s56
      %s73 = sphi 0, %s57
      %s79 = sphi 0, %s81
      %s82 = sphi 0, %s79
      %s83 = sphi 0, %s82
      %s99 = sphi 0, %s83
      %s105 = sphi 0, %s107
      %s108 = sphi 0, %s105
      %s109 = sphi 0, %s108
      %s125 = sphi 0, %s109
      %s131 = sphi 0, %s133
      %s134 = sphi 0, %s131
      %s135 = sphi 0, %s134
      %s151 = sphi 0, %s135
      %s157 = sphi 0, %s159
      %s160 = sphi 0, %s157
      %s161 = sphi 0, %s160
      %s177 = sphi 0, %s161
      %s183 = sphi 0, %s185
      %s186 = sphi 0, %s183
      %s187 = sphi 0, %s186
      %s203 = sphi 0, %s187
      %s209 = sphi 0, %s211
      %s212 = sphi 0, %s209
      %s213 = sphi 0, %s212
      %s229 = sphi 0, %s213
      %s235 = sphi 0, %s237
      %s238 = sphi 0, %s235
      %s239 = sphi 0, %s238
      %s255 = sphi 0, %s239
      %s261 = sphi 0, %s263
      %s264 = sphi 0, %s261
      %s265 = sphi 0, %s264
      %s281 = sphi 0, %s265
      %s287 = sphi 0, %s289
      %s290 = sphi 0, %s287
      %s291 = sphi 0, %s290
      %s307 = sphi 0, %s291
      %s313 = sphi 0, %s315
      %s316 = sphi 0, %s313
      %s317 = sphi 0, %s316
      %s333 = sphi 0, %s317
    $region4: #{_lambda_.1} parent=1 // loop_header_branch
      %34 = sbr.rel (%p32) target = $region8
    $region5: #{_lambda_.1} parent=1 // loop_body
      %s36 = ssub.s32 %s31, 1
      %s37 = ssub.s32 %s31, 2
      %s44 = sadd.s32 1, %s39
      %p45 = scmp.ge.s32.totalorder %s44, 2
      %s46 = scalar_select %p45, 0, %s44
      %s47 = sadd.s32 1, %s38
      %s48 = scalar_select %p45, %s47, %s38
      %p49 = scmp.ge.s32.totalorder %s48, 1
      %s50 = scalar_select %p49, 0, %s48
      %s51 = ssub.s32 %s38, %s50
      %p52 = scmp.eq.s32.totalorder %s51, 0
      %s54 = sadd.s32 %s53, 1
      %s55 = scalar_select %p52, %s53, %s54
      %p58 = pneg %p52
      %p59 = scmp.eq.s32.totalorder %s31, 1
      %p60 = por %p58, %p59
      %p61 = scmp.ne.s32.totalorder %s53, %s56
      %p62 = scmp.eq.s32.totalorder %s31, 0
      %p63 = por %p61, %p62
      %p64 = scmp.ne.s32.totalorder %s53, %s56
      %p65 = scmp.eq.s32.totalorder %s36, 1
      %p66 = por %p64, %p65
      %p67 = scmp.ne.s32.totalorder %s56, %s57
      %p68 = scmp.eq.s32.totalorder %s36, 0
      %p69 = por %p67, %p68
      %p70 = scmp.ne.s32.totalorder %s56, %s57
      %p71 = scmp.eq.s32.totalorder %s37, 1
      %p72 = por %p70, %p71
      %p74 = scmp.ne.s32.totalorder %s57, %s73
      %p75 = scmp.eq.s32.totalorder %s37, 0
      %p76 = por %p74, %p75
      %s77 = ssub.s32 %s38, %s50
      %p78 = scmp.eq.s32.totalorder %s77, 0
      %s80 = sadd.s32 %s79, 1
      %s81 = scalar_select %p78, %s79, %s80
      %p84 = pneg %p78
      %p85 = scmp.eq.s32.totalorder %s31, 1
      %p86 = por %p84, %p85
      %p87 = scmp.ne.s32.totalorder %s79, %s82
      %p88 = scmp.eq.s32.totalorder %s31, 0
      %p89 = por %p87, %p88
      %p90 = scmp.ne.s32.totalorder %s79, %s82
      %p91 = scmp.eq.s32.totalorder %s36, 1
      %p92 = por %p90, %p91
      %p93 = scmp.ne.s32.totalorder %s82, %s83
      %p94 = scmp.eq.s32.totalorder %s36, 0
      %p95 = por %p93, %p94
      %p96 = scmp.ne.s32.totalorder %s82, %s83
      %p97 = scmp.eq.s32.totalorder %s37, 1
      %p98 = por %p96, %p97
      %p100 = scmp.ne.s32.totalorder %s83, %s99
      %p101 = scmp.eq.s32.totalorder %s37, 0
      %p102 = por %p100, %p101
      %s103 = ssub.s32 %s38, %s50
      %p104 = scmp.eq.s32.totalorder %s103, 0
      %s106 = sadd.s32 %s105, 1
      %s107 = scalar_select %p104, %s105, %s106
      %p110 = pneg %p104
      %p111 = scmp.eq.s32.totalorder %s31, 1
      %p112 = por %p110, %p111
      %p113 = scmp.ne.s32.totalorder %s105, %s108
      %p114 = scmp.eq.s32.totalorder %s31, 0
      %p115 = por %p113, %p114
      %p116 = scmp.ne.s32.totalorder %s105, %s108
      %p117 = scmp.eq.s32.totalorder %s36, 1
      %p118 = por %p116, %p117
      %p119 = scmp.ne.s32.totalorder %s108, %s109
      %p120 = scmp.eq.s32.totalorder %s36, 0
      %p121 = por %p119, %p120
      %p122 = scmp.ne.s32.totalorder %s108, %s109
      %p123 = scmp.eq.s32.totalorder %s37, 1
      %p124 = por %p122, %p123
      %p126 = scmp.ne.s32.totalorder %s109, %s125
      %p127 = scmp.eq.s32.totalorder %s37, 0
      %p128 = por %p126, %p127
      %s129 = ssub.s32 %s39, %s46
      %p130 = scmp.eq.s32.totalorder %s129, 0
      %s132 = sadd.s32 %s131, 1
      %s133 = scalar_select %p130, %s131, %s132
      %p136 = pneg %p130
      %p137 = scmp.eq.s32.totalorder %s31, 1
      %p138 = por %p136, %p137
      %p139 = scmp.ne.s32.totalorder %s131, %s134
      %p140 = scmp.eq.s32.totalorder %s31, 0
      %p141 = por %p139, %p140
      %p142 = scmp.ne.s32.totalorder %s131, %s134
      %p143 = scmp.eq.s32.totalorder %s36, 1
      %p144 = por %p142, %p143
      %p145 = scmp.ne.s32.totalorder %s134, %s135
      %p146 = scmp.eq.s32.totalorder %s36, 0
      %p147 = por %p145, %p146
      %p148 = scmp.ne.s32.totalorder %s134, %s135
      %p149 = scmp.eq.s32.totalorder %s37, 1
      %p150 = por %p148, %p149
      %p152 = scmp.ne.s32.totalorder %s135, %s151
      %p153 = scmp.eq.s32.totalorder %s37, 0
      %p154 = por %p152, %p153
      %s155 = ssub.s32 %s39, %s46
      %p156 = scmp.eq.s32.totalorder %s155, 0
      %s158 = sadd.s32 %s157, 1
      %s159 = scalar_select %p156, %s157, %s158
      %p162 = pneg %p156
      %p163 = scmp.eq.s32.totalorder %s31, 1
      %p164 = por %p162, %p163
      %p165 = scmp.ne.s32.totalorder %s157, %s160
      %p166 = scmp.eq.s32.totalorder %s31, 0
      %p167 = por %p165, %p166
      %p168 = scmp.ne.s32.totalorder %s157, %s160
      %p169 = scmp.eq.s32.totalorder %s36, 1
      %p170 = por %p168, %p169
      %p171 = scmp.ne.s32.totalorder %s160, %s161
      %p172 = scmp.eq.s32.totalorder %s36, 0
      %p173 = por %p171, %p172
      %p174 = scmp.ne.s32.totalorder %s160, %s161
      %p175 = scmp.eq.s32.totalorder %s37, 1
      %p176 = por %p174, %p175
      %p178 = scmp.ne.s32.totalorder %s161, %s177
      %p179 = scmp.eq.s32.totalorder %s37, 0
      %p180 = por %p178, %p179
      %s181 = ssub.s32 %s39, %s46
      %p182 = scmp.eq.s32.totalorder %s181, 0
      %s184 = sadd.s32 %s183, 1
      %s185 = scalar_select %p182, %s183, %s184
      %p188 = pneg %p182
      %p189 = scmp.eq.s32.totalorder %s31, 1
      %p190 = por %p188, %p189
      %p191 = scmp.ne.s32.totalorder %s183, %s186
      %p192 = scmp.eq.s32.totalorder %s31, 0
      %p193 = por %p191, %p192
      %p194 = scmp.ne.s32.totalorder %s183, %s186
      %p195 = scmp.eq.s32.totalorder %s36, 1
      %p196 = por %p194, %p195
      %p197 = scmp.ne.s32.totalorder %s186, %s187
      %p198 = scmp.eq.s32.totalorder %s36, 0
      %p199 = por %p197, %p198
      %p200 = scmp.ne.s32.totalorder %s186, %s187
      %p201 = scmp.eq.s32.totalorder %s37, 1
      %p202 = por %p200, %p201
      %p204 = scmp.ne.s32.totalorder %s187, %s203
      %p205 = scmp.eq.s32.totalorder %s37, 0
      %p206 = por %p204, %p205
      %s207 = ssub.s32 %s39, %s46
      %p208 = scmp.eq.s32.totalorder %s207, 0
      %s210 = sadd.s32 %s209, 1
      %s211 = scalar_select %p208, %s209, %s210
      %p214 = pneg %p208
      %p215 = scmp.eq.s32.totalorder %s31, 1
      %p216 = por %p214, %p215
      %p217 = scmp.ne.s32.totalorder %s209, %s212
      %p218 = scmp.eq.s32.totalorder %s31, 0
      %p219 = por %p217, %p218
      %p220 = scmp.ne.s32.totalorder %s209, %s212
      %p221 = scmp.eq.s32.totalorder %s36, 1
      %p222 = por %p220, %p221
      %p223 = scmp.ne.s32.totalorder %s212, %s213
      %p224 = scmp.eq.s32.totalorder %s36, 0
      %p225 = por %p223, %p224
      %p226 = scmp.ne.s32.totalorder %s212, %s213
      %p227 = scmp.eq.s32.totalorder %s37, 1
      %p228 = por %p226, %p227
      %p230 = scmp.ne.s32.totalorder %s213, %s229
      %p231 = scmp.eq.s32.totalorder %s37, 0
      %p232 = por %p230, %p231
      %s233 = ssub.s32 %s39, %s46
      %p234 = scmp.eq.s32.totalorder %s233, 0
      %s236 = sadd.s32 %s235, 1
      %s237 = scalar_select %p234, %s235, %s236
      %p240 = pneg %p234
      %p241 = scmp.eq.s32.totalorder %s31, 1
      %p242 = por %p240, %p241
      %p243 = scmp.ne.s32.totalorder %s235, %s238
      %p244 = scmp.eq.s32.totalorder %s31, 0
      %p245 = por %p243, %p244
      %p246 = scmp.ne.s32.totalorder %s235, %s238
      %p247 = scmp.eq.s32.totalorder %s36, 1
      %p248 = por %p246, %p247
      %p249 = scmp.ne.s32.totalorder %s238, %s239
      %p250 = scmp.eq.s32.totalorder %s36, 0
      %p251 = por %p249, %p250
      %p252 = scmp.ne.s32.totalorder %s238, %s239
      %p253 = scmp.eq.s32.totalorder %s37, 1
      %p254 = por %p252, %p253
      %p256 = scmp.ne.s32.totalorder %s239, %s255
      %p257 = scmp.eq.s32.totalorder %s37, 0
      %p258 = por %p256, %p257
      %s259 = ssub.s32 %s39, %s46
      %p260 = scmp.eq.s32.totalorder %s259, 0
      %s262 = sadd.s32 %s261, 1
      %s263 = scalar_select %p260, %s261, %s262
      %p266 = pneg %p260
      %p267 = scmp.eq.s32.totalorder %s31, 1
      %p268 = por %p266, %p267
      %p269 = scmp.ne.s32.totalorder %s261, %s264
      %p270 = scmp.eq.s32.totalorder %s31, 0
      %p271 = por %p269, %p270
      %p272 = scmp.ne.s32.totalorder %s261, %s264
      %p273 = scmp.eq.s32.totalorder %s36, 1
      %p274 = por %p272, %p273
      %p275 = scmp.ne.s32.totalorder %s264, %s265
      %p276 = scmp.eq.s32.totalorder %s36, 0
      %p277 = por %p275, %p276
      %p278 = scmp.ne.s32.totalorder %s264, %s265
      %p279 = scmp.eq.s32.totalorder %s37, 1
      %p280 = por %p278, %p279
      %p282 = scmp.ne.s32.totalorder %s265, %s281
      %p283 = scmp.eq.s32.totalorder %s37, 0
      %p284 = por %p282, %p283
      %s285 = ssub.s32 %s39, %s46
      %p286 = scmp.eq.s32.totalorder %s285, 0
      %s288 = sadd.s32 %s287, 1
      %s289 = scalar_select %p286, %s287, %s288
      %p292 = pneg %p286
      %p293 = scmp.eq.s32.totalorder %s31, 1
      %p294 = por %p292, %p293
      %p295 = scmp.ne.s32.totalorder %s287, %s290
      %p296 = scmp.eq.s32.totalorder %s31, 0
      %p297 = por %p295, %p296
      %p298 = scmp.ne.s32.totalorder %s287, %s290
      %p299 = scmp.eq.s32.totalorder %s36, 1
      %p300 = por %p298, %p299
      %p301 = scmp.ne.s32.totalorder %s290, %s291
      %p302 = scmp.eq.s32.totalorder %s36, 0
      %p303 = por %p301, %p302
      %p304 = scmp.ne.s32.totalorder %s290, %s291
      %p305 = scmp.eq.s32.totalorder %s37, 1
      %p306 = por %p304, %p305
      %p308 = scmp.ne.s32.totalorder %s291, %s307
      %p309 = scmp.eq.s32.totalorder %s37, 0
      %p310 = por %p308, %p309
      %s311 = ssub.s32 %s38, %s50
      %p312 = scmp.eq.s32.totalorder %s311, 0
      %s314 = sadd.s32 %s313, 1
      %s315 = scalar_select %p312, %s313, %s314
      %p318 = pneg %p312
      %p319 = scmp.eq.s32.totalorder %s31, 1
      %p320 = por %p318, %p319
      %p321 = scmp.ne.s32.totalorder %s313, %s316
      %p322 = scmp.eq.s32.totalorder %s31, 0
      %p323 = por %p321, %p322
      %p324 = scmp.ne.s32.totalorder %s313, %s316
      %p325 = scmp.eq.s32.totalorder %s36, 1
      %p326 = por %p324, %p325
      %p327 = scmp.ne.s32.totalorder %s316, %s317
      %p328 = scmp.eq.s32.totalorder %s36, 0
      %p329 = por %p327, %p328
      %p330 = scmp.ne.s32.totalorder %s316, %s317
      %p331 = scmp.eq.s32.totalorder %s37, 1
      %p332 = por %p330, %p331
      %p334 = scmp.ne.s32.totalorder %s317, %s333
      %p335 = scmp.eq.s32.totalorder %s37, 0
      %p336 = por %p334, %p335
      %p337 = scmp.le.s32.totalorder 1, %s31
      %p338 = scmp.lt.s32.totalorder %s31, 3
      %p339 = pnand %p337, %p338
      %p340 = pneg %p339
      // Predicated region
      $region9: #{_lambda_.1} parent=5 // pred_check
        _
      $region10: #{_lambda_.1} parent=5 // pred_check_branch
        %342 = sbr.rel (%p339) target = $region12
      $region11: #{_lambda_.1} parent=5 // pred_region
        %s343 = ssub.s32 %s31, 1
        // Predicated region
        $region13: #{_lambda_.1} parent=11 // pred_check
          %p344 = pneg %p69
        $region14: #{_lambda_.1} parent=11 // pred_check_branch
          %346 = sbr.rel (%p344) target = $region16
        $region15: #{_lambda_.1} parent=11 // pred_region
          %s347 = smul.u32 2, %s40
          %s349 = ssub.s32 256, 256
          %350 = vsyncadd [#allocation3], %s349
          %s351 = smul.addr %s347, 128
          %s352 = scalar_lea.hbm %s0, %s351
          %s353 = sshll.u32 [#allocation2], 4
          %s354 = int_to_ptr.vmem [resolvable:$true] %s353
          %359 = dma.hbm_to_vmem [thread:$0]  %s352, 256, %s354, [#allocation3], 128, 128, 8
        $region16: #{_lambda_.1} parent=11 // pred_fallthru
          _
        // Predicated region
        $region17: #{_lambda_.1} parent=11 // pred_check
          %p360 = pneg %p95
        $region18: #{_lambda_.1} parent=11 // pred_check_branch
          %362 = sbr.rel (%p360) target = $region20
        $region19: #{_lambda_.1} parent=11 // pred_region
          %s363 = smul.u32 2, %s40
          %s365 = ssub.s32 32, 32
          %366 = vsyncadd [#allocation6], %s365
          %s367 = smul.addr %s363, 16
          %s368 = scalar_lea.hbm %s1, %s367
          %s369 = sshll.u32 [#allocation5], 4
          %s370 = int_to_ptr.vmem [resolvable:$true] %s369
          %375 = dma.hbm_to_vmem [thread:$0]  %s368, 32, %s370, [#allocation6], 16, 16, 1
        $region20: #{_lambda_.1} parent=11 // pred_fallthru
          _
        // Predicated region
        $region21: #{_lambda_.1} parent=11 // pred_check
          %p376 = pneg %p121
        $region22: #{_lambda_.1} parent=11 // pred_check_branch
          %378 = sbr.rel (%p376) target = $region24
        $region23: #{_lambda_.1} parent=11 // pred_region
          %s379 = smul.u32 2, %s40
          %s381 = ssub.s32 256, 256
          %382 = vsyncadd [#allocation6], %s381
          %s383 = smul.addr %s379, 128
          %s384 = scalar_lea.hbm %s2, %s383
          %s385 = sshll.u32 [#allocation7], 4
          %s386 = int_to_ptr.vmem [resolvable:$true] %s385
          %391 = dma.hbm_to_vmem [thread:$0]  %s384, 256, %s386, [#allocation6], 128, 128, 8
        $region24: #{_lambda_.1} parent=11 // pred_fallthru
          _
      $region12: #{_lambda_.1} parent=5 // pred_fallthru
        _
      %p392 = scmp.lt.s32.totalorder %s31, 2
      // Predicated region
      $region25: #{_lambda_.1} parent=5 // pred_check
        %p393 = pneg %p392
      $region26: #{_lambda_.1} parent=5 // pred_check_branch
        %395 = sbr.rel (%p393) target = $region28
      $region27: #{_lambda_.1} parent=5 // pred_region
        // Predicated region
        $region29: #{_lambda_.1} parent=27 // pred_check
          %p396 = pneg %p141
        $region30: #{_lambda_.1} parent=27 // pred_check_branch
          %398 = sbr.rel (%p396) target = $region32
        $region31: #{_lambda_.1} parent=27 // pred_region
          %s399 = sand.u32 %s31, 1
          %s400 = scalar_lea.sflag [#allocation9], %s399
          %s401 = sand.u32 %s131, 1
          %s402 = smul.addr %s401, 16
          %s403 = scalar_lea.vmem [#allocation8], %s402
          %s405 = ssub.s32 256, 256
          %406 = vsyncadd %s400, %s405
          %s407 = smul.addr %s39, 4
          %s408 = smul.addr %s407, 64
          %s409 = scalar_lea.hbm %s3, %s408
          %s410 = sshll.u32 %s403, 4
          %s411 = int_to_ptr.vmem [resolvable:$true] %s410
          %416 = dma.hbm_to_vmem [thread:$0]  %s409, 256, %s411, %s400, 64, 64, 4
        $region32: #{_lambda_.1} parent=27 // pred_fallthru
          _
        // Predicated region
        $region33: #{_lambda_.1} parent=27 // pred_check
          %p417 = pneg %p167
        $region34: #{_lambda_.1} parent=27 // pred_check_branch
          %419 = sbr.rel (%p417) target = $region36
        $region35: #{_lambda_.1} parent=27 // pred_region
          %s420 = sand.u32 %s31, 1
          %s421 = scalar_lea.sflag [#allocation9], %s420
          %s422 = sand.u32 %s157, 1
          %s423 = scalar_lea.vmem [#allocation10], %s422
          %s425 = ssub.s32 16, 16
          %426 = vsyncadd %s421, %s425
          %s427 = smul.addr %s39, 16
          %s428 = scalar_lea.hbm %s4, %s427
          %s430 = sshll.u32 %s423, 4
          %s431 = int_to_ptr.vmem [resolvable:$true] %s430
          %433 = dma.hbm_to_vmem [thread:$0]  %s428, 16, %s431, %s421
        $region36: #{_lambda_.1} parent=27 // pred_fallthru
          _
        // Predicated region
        $region37: #{_lambda_.1} parent=27 // pred_check
          %p434 = pneg %p193
        $region38: #{_lambda_.1} parent=27 // pred_check_branch
          %436 = sbr.rel (%p434) target = $region40
        $region39: #{_lambda_.1} parent=27 // pred_region
          %s437 = sand.u32 %s31, 1
          %s438 = scalar_lea.sflag [#allocation12], %s437
          %s439 = sand.u32 %s183, 1
          %s440 = smul.addr %s439, 16
          %s441 = scalar_lea.vmem [#allocation11], %s440
          %s443 = ssub.s32 256, 256
          %444 = vsyncadd %s438, %s443
          %s445 = smul.addr %s39, 4
          %s446 = smul.addr %s445, 64
          %s447 = scalar_lea.hbm %s5, %s446
          %s448 = sshll.u32 %s441, 4
          %s449 = int_to_ptr.vmem [resolvable:$true] %s448
          %454 = dma.hbm_to_vmem [thread:$0]  %s447, 256, %s449, %s438, 64, 64, 4
        $region40: #{_lambda_.1} parent=27 // pred_fallthru
          _
        // Predicated region
        $region41: #{_lambda_.1} parent=27 // pred_check
          %p455 = pneg %p219
        $region42: #{_lambda_.1} parent=27 // pred_check_branch
          %457 = sbr.rel (%p455) target = $region44
        $region43: #{_lambda_.1} parent=27 // pred_region
          %s458 = sand.u32 %s31, 1
          %s459 = scalar_lea.sflag [#allocation12], %s458
          %s460 = sand.u32 %s209, 1
          %s461 = smul.addr %s460, 8
          %s462 = scalar_lea.vmem [#allocation13], %s461
          %s464 = ssub.s32 128, 128
          %465 = vsyncadd %s459, %s464
          %s466 = smul.addr %s39, 128
          %s467 = scalar_lea.hbm %s6, %s466
          %s469 = sshll.u32 %s462, 4
          %s470 = int_to_ptr.vmem [resolvable:$true] %s469
          %472 = dma.hbm_to_vmem [thread:$0]  %s467, 128, %s470, %s459
        $region44: #{_lambda_.1} parent=27 // pred_fallthru
          _
        // Predicated region
        $region45: #{_lambda_.1} parent=27 // pred_check
          %p473 = pneg %p245
        $region46: #{_lambda_.1} parent=27 // pred_check_branch
          %475 = sbr.rel (%p473) target = $region48
        $region47: #{_lambda_.1} parent=27 // pred_region
          %s476 = sand.u32 %s31, 1
          %s477 = scalar_lea.sflag [#allocation15], %s476
          %s478 = sand.u32 %s235, 1
          %s479 = smul.addr %s478, 144
          %s480 = scalar_lea.vmem [#allocation14], %s479
          %s482 = ssub.s32 2304, 2304
          %483 = vsyncadd %s477, %s482
          %s484 = smul.addr %s39, 36
          %s485 = smul.addr %s484, 64
          %s486 = scalar_lea.hbm %s7, %s485
          %s487 = sshll.u32 %s480, 4
          %s488 = int_to_ptr.vmem [resolvable:$true] %s487
          %493 = dma.hbm_to_vmem [thread:$0]  %s486, 2304, %s488, %s477, 64, 64, 4
        $region48: #{_lambda_.1} parent=27 // pred_fallthru
          _
        // Predicated region
        $region49: #{_lambda_.1} parent=27 // pred_check
          %p494 = pneg %p271
        $region50: #{_lambda_.1} parent=27 // pred_check_branch
          %496 = sbr.rel (%p494) target = $region52
        $region51: #{_lambda_.1} parent=27 // pred_region
          %s497 = sand.u32 %s31, 1
          %s498 = scalar_lea.sflag [#allocation15], %s497
          %s499 = sand.u32 %s261, 1
          %s500 = scalar_lea.vmem [#allocation16], %s499
          %s502 = ssub.s32 16, 16
          %503 = vsyncadd %s498, %s502
          %s504 = smul.addr %s39, 16
          %s505 = scalar_lea.hbm %s8, %s504
          %s507 = sshll.u32 %s500, 4
          %s508 = int_to_ptr.vmem [resolvable:$true] %s507
          %510 = dma.hbm_to_vmem [thread:$0]  %s505, 16, %s508, %s498
        $region52: #{_lambda_.1} parent=27 // pred_fallthru
          _
        // Predicated region
        $region53: #{_lambda_.1} parent=27 // pred_check
          %p511 = pneg %p297
        $region54: #{_lambda_.1} parent=27 // pred_check_branch
          %513 = sbr.rel (%p511) target = $region56
        $region55: #{_lambda_.1} parent=27 // pred_region
          %s514 = sand.u32 %s287, 1
          %s515 = scalar_lea.sflag [#allocation18], %s514
          %s516 = sand.u32 %s287, 1
          %s517 = smul.addr %s516, 32
          %s518 = scalar_lea.vmem [#allocation17], %s517
          %s520 = ssub.s32 512, 512
          %521 = vsyncadd %s515, %s520
          %s522 = smul.addr %s39, 8
          %s523 = smul.addr %s522, 64
          %s524 = scalar_lea.hbm %s9, %s523
          %s525 = sshll.u32 %s518, 4
          %s526 = int_to_ptr.vmem [resolvable:$true] %s525
          %531 = dma.hbm_to_vmem [thread:$0]  %s524, 512, %s526, %s515, 64, 64, 4
        $region56: #{_lambda_.1} parent=27 // pred_fallthru
          _
      $region28: #{_lambda_.1} parent=5 // pred_fallthru
        _
      %p532 = scmp.le.s32.totalorder 1, %s31
      %p533 = scmp.lt.s32.totalorder %s31, 3
      %p534 = pnand %p532, %p533
      %p535 = pneg %p534
      // Predicated region
      $region57: #{_lambda_.1} parent=5 // pred_check
        _
      $region58: #{_lambda_.1} parent=5 // pred_check_branch
        %537 = sbr.rel (%p534) target = $region60
      $region59: #{_lambda_.1} parent=5 // pred_region
        %s538 = ssub.s32 %s31, 1
        // Predicated region
        $region61: #{_lambda_.1} parent=59 // pred_check
          %p539 = pneg %p69
        $region62: #{_lambda_.1} parent=59 // pred_check_branch
          %541 = sbr.rel (%p539) target = $region64
        $region63: #{_lambda_.1} parent=59 // pred_region
          %542 = dma.done [#allocation3], 256
        $region64: #{_lambda_.1} parent=59 // pred_fallthru
          _
        // Predicated region
        $region65: #{_lambda_.1} parent=59 // pred_check
          %p543 = pneg %p95
        $region66: #{_lambda_.1} parent=59 // pred_check_branch
          %545 = sbr.rel (%p543) target = $region68
        $region67: #{_lambda_.1} parent=59 // pred_region
          %546 = dma.done [#allocation6], 32
        $region68: #{_lambda_.1} parent=59 // pred_fallthru
          _
        // Predicated region
        $region69: #{_lambda_.1} parent=59 // pred_check
          %p547 = pneg %p121
        $region70: #{_lambda_.1} parent=59 // pred_check_branch
          %549 = sbr.rel (%p547) target = $region72
        $region71: #{_lambda_.1} parent=59 // pred_region
          %550 = dma.done [#allocation6], 256
        $region72: #{_lambda_.1} parent=59 // pred_fallthru
          _
        %s551 = sand.u32 %s36, 1
        %s552 = scalar_lea.sflag [#allocation9], %s551
        %s553 = sand.u32 %s134, 1
        %s554 = smul.addr %s553, 16
        %s555 = scalar_lea.vmem [#allocation8], %s554
        // Predicated region
        $region73: #{_lambda_.1} parent=59 // pred_check
          %p556 = pneg %p147
        $region74: #{_lambda_.1} parent=59 // pred_check_branch
          %558 = sbr.rel (%p556) target = $region76
        $region75: #{_lambda_.1} parent=59 // pred_region
          %559 = dma.done %s552, 256
        $region76: #{_lambda_.1} parent=59 // pred_fallthru
          _
        %s560 = sand.u32 %s36, 1
        %s561 = scalar_lea.sflag [#allocation9], %s560
        %s562 = sand.u32 %s160, 1
        %s563 = scalar_lea.vmem [#allocation10], %s562
        // Predicated region
        $region77: #{_lambda_.1} parent=59 // pred_check
          %p564 = pneg %p173
        $region78: #{_lambda_.1} parent=59 // pred_check_branch
          %566 = sbr.rel (%p564) target = $region80
        $region79: #{_lambda_.1} parent=59 // pred_region
          %567 = dma.done %s561, 16
        $region80: #{_lambda_.1} parent=59 // pred_fallthru
          _
        %s568 = sand.u32 %s36, 1
        %s569 = scalar_lea.sflag [#allocation12], %s568
        %s570 = sand.u32 %s186, 1
        %s571 = smul.addr %s570, 16
        %s572 = scalar_lea.vmem [#allocation11], %s571
        // Predicated region
        $region81: #{_lambda_.1} parent=59 // pred_check
          %p573 = pneg %p199
        $region82: #{_lambda_.1} parent=59 // pred_check_branch
          %575 = sbr.rel (%p573) target = $region84
        $region83: #{_lambda_.1} parent=59 // pred_region
          %576 = dma.done %s569, 256
        $region84: #{_lambda_.1} parent=59 // pred_fallthru
          _
        %s577 = sand.u32 %s36, 1
        %s578 = scalar_lea.sflag [#allocation12], %s577
        %s579 = sand.u32 %s212, 1
        %s580 = smul.addr %s579, 8
        %s581 = scalar_lea.vmem [#allocation13], %s580
        // Predicated region
        $region85: #{_lambda_.1} parent=59 // pred_check
          %p582 = pneg %p225
        $region86: #{_lambda_.1} parent=59 // pred_check_branch
          %584 = sbr.rel (%p582) target = $region88
        $region87: #{_lambda_.1} parent=59 // pred_region
          %585 = dma.done %s578, 128
        $region88: #{_lambda_.1} parent=59 // pred_fallthru
          _
        %s586 = sand.u32 %s36, 1
        %s587 = scalar_lea.sflag [#allocation15], %s586
        %s588 = sand.u32 %s238, 1
        %s589 = smul.addr %s588, 144
        %s590 = scalar_lea.vmem [#allocation14], %s589
        // Predicated region
        $region89: #{_lambda_.1} parent=59 // pred_check
          %p591 = pneg %p251
        $region90: #{_lambda_.1} parent=59 // pred_check_branch
          %593 = sbr.rel (%p591) target = $region92
        $region91: #{_lambda_.1} parent=59 // pred_region
          %594 = dma.done %s587, 2304
        $region92: #{_lambda_.1} parent=59 // pred_fallthru
          _
        %s595 = sand.u32 %s36, 1
        %s596 = scalar_lea.sflag [#allocation15], %s595
        %s597 = sand.u32 %s264, 1
        %s598 = scalar_lea.vmem [#allocation16], %s597
        // Predicated region
        $region93: #{_lambda_.1} parent=59 // pred_check
          %p599 = pneg %p277
        $region94: #{_lambda_.1} parent=59 // pred_check_branch
          %601 = sbr.rel (%p599) target = $region96
        $region95: #{_lambda_.1} parent=59 // pred_region
          %602 = dma.done %s596, 16
        $region96: #{_lambda_.1} parent=59 // pred_fallthru
          _
        %s603 = sand.u32 %s290, 1
        %s604 = scalar_lea.sflag [#allocation18], %s603
        %s605 = sand.u32 %s290, 1
        %s606 = smul.addr %s605, 32
        %s607 = scalar_lea.vmem [#allocation17], %s606
        // Predicated region
        $region97: #{_lambda_.1} parent=59 // pred_check
          %p608 = pneg %p303
        $region98: #{_lambda_.1} parent=59 // pred_check_branch
          %610 = sbr.rel (%p608) target = $region100
        $region99: #{_lambda_.1} parent=59 // pred_region
          %611 = dma.done %s604, 512
        $region100: #{_lambda_.1} parent=59 // pred_fallthru
          _
        %p612 = pneg %p69
        %p613 = pneg %p66
        %p614 = pneg %p95
        %p615 = pneg %p92
        %p616 = pneg %p121
        %p617 = pneg %p118
        %s618 = sand.u32 %s36, 1
        %s619 = scalar_lea.sflag [#allocation9], %s618
        %s620 = sand.u32 %s134, 1
        %s621 = smul.addr %s620, 16
        %s622 = scalar_lea.vmem [#allocation8], %s621
        %p623 = pneg %p147
        %p624 = pneg %p144
        %s625 = sand.u32 %s36, 1
        %s626 = scalar_lea.sflag [#allocation9], %s625
        %s627 = sand.u32 %s160, 1
        %s628 = scalar_lea.vmem [#allocation10], %s627
        %p629 = pneg %p173
        %p630 = pneg %p170
        %s631 = sand.u32 %s36, 1
        %s632 = scalar_lea.sflag [#allocation12], %s631
        %s633 = sand.u32 %s186, 1
        %s634 = smul.addr %s633, 16
        %s635 = scalar_lea.vmem [#allocation11], %s634
        %p636 = pneg %p199
        %p637 = pneg %p196
        %s638 = sand.u32 %s36, 1
        %s639 = scalar_lea.sflag [#allocation12], %s638
        %s640 = sand.u32 %s212, 1
        %s641 = smul.addr %s640, 8
        %s642 = scalar_lea.vmem [#allocation13], %s641
        %p643 = pneg %p225
        %p644 = pneg %p222
        %s645 = sand.u32 %s36, 1
        %s646 = scalar_lea.sflag [#allocation15], %s645
        %s647 = sand.u32 %s238, 1
        %s648 = smul.addr %s647, 144
        %s649 = scalar_lea.vmem [#allocation14], %s648
        %p650 = pneg %p251
        %p651 = pneg %p248
        %s652 = sand.u32 %s36, 1
        %s653 = scalar_lea.sflag [#allocation15], %s652
        %s654 = sand.u32 %s264, 1
        %s655 = scalar_lea.vmem [#allocation16], %s654
        %p656 = pneg %p277
        %p657 = pneg %p274
        %s658 = sand.u32 %s290, 1
        %s659 = scalar_lea.sflag [#allocation18], %s658
        %s660 = sand.u32 %s290, 1
        %s661 = smul.addr %s660, 32
        %s662 = scalar_lea.vmem [#allocation17], %s661
        %p663 = pneg %p303
        %p664 = pneg %p300
        %p665 = pneg %p329
        %p666 = pneg %p326
        %s667 = smul.u32 2, %s40
        %s668 = smul.u32 2, %s40
        %s669 = smul.u32 2, %s40
        %s670 = smul.u32 2, %s40
        %p672 = scmp.eq.s32.totalorder %s41, 0
        // Predicated region
        $region101: #{_lambda_.1} parent=59 // pred_check
          %p673 = pneg %p672
        $region102: #{_lambda_.1} parent=59 // pred_check_branch
          %675 = sbr.rel (%p673) target = $region104
        $region103: #{_lambda_.1} parent=59 // pred_region
          %v676 = vld [vmem:[#allocation2] sm:$0xff]
          %v677 = vld [vmem:[#allocation2 + $0x8] sm:$0xff]
          %vm678 = vcmask 261120
          %679 = vst.msk [vmem:[#allocation19] sm:$0xff] %vm678, %v676
          %680 = vst.msk [vmem:[#allocation19 + $0x8] sm:$0xff] %vm678, %v677
        $region104: #{_lambda_.1} parent=59 // pred_fallthru
          _
        %v681 = vld [vmem:[#allocation19] sm:$0xff]
        %v682 = vld [vmem:[#allocation19 + $0x8] sm:$0xff]
        %v683 = vpack.c.bf16 %v682, %v681
        %v684 = vld [vmem:[#allocation5] sm:$0x1]
        %v685 = vld [vmem:[#allocation5 + $0x1] sm:$0x1]
        %v686 = vld [vmem:[#allocation7] sm:$0xff]
        %v687 = vld [vmem:[#allocation7 + $0x8] sm:$0xff]
        %v688 = vld [vmem:[%s581] sm:$0x3f]
        %v689 = vld [vmem:[%s555] sm:$0xf]
        %v690 = vld [vmem:[%s555 + $0x4] sm:$0xf]
        %v691 = vld [vmem:[%s555 + $0x8] sm:$0xf]
        %v692 = vld [vmem:[%s555 + $0xc] sm:$0xf]
        %v693 = vld [vmem:[%s563] sm:$0x1]
        %v695 = vlaneseq
        %v696 = vshrl.u32 %v695, 7
        %v697 = vsub.s32 0, %v696
        %v698 = vrot.slane %v693, %v697
        %v704 = vunpack.c.l.b16 %v689
        %v705 = vunpack.c.l.b16 %v690
        %v706 = vunpack.c.l.b16 %v691
        %v707 = vunpack.c.l.b16 %v692
        %v708 = vpack.c.b16 %v705, %v704
        %v709 = vpack.c.b16 %v707, %v706
        %vm712 = vcmask 261120
        %v714 = vsel %vm712, %v683, 0
        %716 = vmatprep.subr.bf16.mxu0 0
        %717 = vmatpush1.bf16.msra.mxu0 %v708
        %718 = vmatprep.subr.bf16.mxu0 0
        %719 = vmatpush1.bf16.msra.mxu0 %v709
        %720 = vmatprep.subr.bf16.mxu0 0
        %721 = vmatpush1.bf16.msra.mxu0 0
        %722 = vmatprep.subr.bf16.mxu0 0
        %723 = vmatpush1.bf16.msra.mxu0 0
        %724 = vmatprep.subr.bf16.mxu0 0
        %725 = vmatpush1.bf16.msra.mxu0 0
        %726 = vmatprep.subr.bf16.mxu0 0
        %727 = vmatpush1.bf16.msra.mxu0 0
        %728 = vmatprep.subr.bf16.mxu0 0
        %729 = vmatpush1.bf16.msra.mxu0 0
        %730 = vmatprep.subr.bf16.mxu0 0
        %731 = vmatpush1.bf16.msra.mxu0 0
        %732 = vmatprep.subr.bf16.mxu0 0
        %733 = vmatpush1.bf16.msra.mxu0 0
        %734 = vmatprep.subr.bf16.mxu0 0
        %735 = vmatpush1.bf16.msra.mxu0 0
        %736 = vmatprep.subr.bf16.mxu0 0
        %737 = vmatpush1.bf16.msra.mxu0 0
        %738 = vmatprep.subr.bf16.mxu0 0
        %739 = vmatpush1.bf16.msra.mxu0 0
        %740 = vmatprep.subr.bf16.mxu0 0
        %741 = vmatpush1.bf16.msra.mxu0 0
        %742 = vmatprep.subr.bf16.mxu0 0
        %743 = vmatpush1.bf16.msra.mxu0 0
        %744 = vmatprep.subr.bf16.mxu0 0
        %745 = vmatpush1.bf16.msra.mxu0 0
        %746 = vmatprep.subr.bf16.mxu0 0
        %747 = vmatpush1.bf16.msra.mxu0 0
        %748 = vmatprep.mubr.bf16.mxu0 0
        %749 = vmatmul.mubr.bf16.gmra.mrb[0].mxu0 %v714
        %v750 = vpop.f32.mrb[0].mxu0
        %v751 = vadd.f32 %v698, %v750
        %v752 = vpop.f32.mrb[0].mxu0
        %v753 = vpop.f32.mrb[0].mxu0
        %v754 = vadd.f32 %v698, %v753
        %v755 = vpop.f32.mrb[0].mxu0
        %756 = vdwg.mxu0
        %v757 = vld [vmem:[%s572] sm:$0xf]
        %v758 = vld [vmem:[%s572 + $0x4] sm:$0xf]
        %v759 = vld [vmem:[%s572 + $0x8] sm:$0xf]
        %v760 = vld [vmem:[%s572 + $0xc] sm:$0xf]
        %v761 = vpack.c.bf16 %v751, %v751
        %v762 = vpack.c.bf16 %v754, %v754
        %764 = vrot.lane.b32.xlu0 %v761, 96
        %v765 = vpop.permute.xlu0 %764
        %vm766 = vcmask 130048
        %v768 = vsel %vm766, %v761, 0
        %v771 = vsel %vm766, %v765, 0
        %773 = vmatprep.subr.bf16.mxu0 0
        %774 = vmatpush1.bf16.xpose.msra.mxu0 %v771
        %775 = vmatprep.subr.bf16.mxu0 0
        %776 = vmatpush1.bf16.xpose.msra.mxu0 0
        %777 = vmatprep.subr.bf16.mxu0 0
        %778 = vmatpush1.bf16.xpose.msra.mxu0 0
        %779 = vmatprep.subr.bf16.mxu0 0
        %780 = vmatpush1.bf16.xpose.msra.mxu0 0
        %781 = vmatprep.subr.bf16.mxu0 0
        %782 = vmatpush1.bf16.xpose.msra.mxu0 0
        %783 = vmatprep.subr.bf16.mxu0 0
        %784 = vmatpush1.bf16.xpose.msra.mxu0 0
        %785 = vmatprep.subr.bf16.mxu0 0
        %786 = vmatpush1.bf16.xpose.msra.mxu0 0
        %787 = vmatprep.subr.bf16.mxu0 0
        %788 = vmatpush1.bf16.xpose.msra.mxu0 0
        %789 = vmatprep.subr.bf16.mxu0 0
        %790 = vmatpush1.bf16.xpose.msra.mxu0 0
        %791 = vmatprep.subr.bf16.mxu0 0
        %792 = vmatpush1.bf16.xpose.msra.mxu0 0
        %793 = vmatprep.subr.bf16.mxu0 0
        %794 = vmatpush1.bf16.xpose.msra.mxu0 0
        %795 = vmatprep.subr.bf16.mxu0 0
        %796 = vmatpush1.bf16.xpose.msra.mxu0 0
        %797 = vmatprep.subr.bf16.mxu0 0
        %798 = vmatpush1.bf16.xpose.msra.mxu0 0
        %799 = vmatprep.subr.bf16.mxu0 0
        %800 = vmatpush1.bf16.xpose.msra.mxu0 0
        %801 = vmatprep.subr.bf16.mxu0 0
        %802 = vmatpush1.bf16.xpose.msra.mxu0 0
        %803 = vmatprep.subr.bf16.mxu0 0
        %804 = vmatpush1.bf16.xpose.msra.mxu0 0
        %805 = vmatprep.mubr.bf16.mxu0 0
        %806 = vmatmul.mubr.bf16.gmra.mrb[0].mxu0 %v768
        %v807 = vpop.f32.mrb[0].mxu0
        %v808 = vadd.f32 0.0, %v807
        %v809 = vpop.f32.mrb[0].mxu0
        %v810 = vpop.f32.mrb[0].mxu0
        %v811 = vpop.f32.mrb[0].mxu0
        %812 = vdwg.mxu0
        %814 = vrot.lane.b32.xlu0 %v762, 96
        %v815 = vpop.permute.xlu0 %814
        %v817 = vsel %vm766, %v762, 0
        %v820 = vsel %vm766, %v815, 0
        %822 = vmatprep.subr.bf16.mxu0 0
        %823 = vmatpush1.bf16.xpose.msra.mxu0 %v820
        %824 = vmatprep.subr.bf16.mxu0 0
        %825 = vmatpush1.bf16.xpose.msra.mxu0 0
        %826 = vmatprep.subr.bf16.mxu0 0
        %827 = vmatpush1.bf16.xpose.msra.mxu0 0
        %828 = vmatprep.subr.bf16.mxu0 0
        %829 = vmatpush1.bf16.xpose.msra.mxu0 0
        %830 = vmatprep.subr.bf16.mxu0 0
        %831 = vmatpush1.bf16.xpose.msra.mxu0 0
        %832 = vmatprep.subr.bf16.mxu0 0
        %833 = vmatpush1.bf16.xpose.msra.mxu0 0
        %834 = vmatprep.subr.bf16.mxu0 0
        %835 = vmatpush1.bf16.xpose.msra.mxu0 0
        %836 = vmatprep.subr.bf16.mxu0 0
        %837 = vmatpush1.bf16.xpose.msra.mxu0 0
        %838 = vmatprep.subr.bf16.mxu0 0
        %839 = vmatpush1.bf16.xpose.msra.mxu0 0
        %840 = vmatprep.subr.bf16.mxu0 0
        %841 = vmatpush1.bf16.xpose.msra.mxu0 0
        %842 = vmatprep.subr.bf16.mxu0 0
        %843 = vmatpush1.bf16.xpose.msra.mxu0 0
        %844 = vmatprep.subr.bf16.mxu0 0
        %845 = vmatpush1.bf16.xpose.msra.mxu0 0
        %846 = vmatprep.subr.bf16.mxu0 0
        %847 = vmatpush1.bf16.xpose.msra.mxu0 0
        %848 = vmatprep.subr.bf16.mxu0 0
        %849 = vmatpush1.bf16.xpose.msra.mxu0 0
        %850 = vmatprep.subr.bf16.mxu0 0
        %851 = vmatpush1.bf16.xpose.msra.mxu0 0
        %852 = vmatprep.subr.bf16.mxu0 0
        %853 = vmatpush1.bf16.xpose.msra.mxu0 0
        %854 = vmatprep.mubr.bf16.mxu0 0
        %855 = vmatmul.mubr.bf16.gmra.mrb[0].mxu0 %v817
        %v856 = vpop.f32.mrb[0].mxu0
        %v857 = vadd.f32 0.0, %v856
        %v858 = vpop.f32.mrb[0].mxu0
        %v859 = vpop.f32.mrb[0].mxu0
        %v860 = vpop.f32.mrb[0].mxu0
        %861 = vdwg.mxu0
        %v862 = vmul.f32 %v808, 0.25
        %v863 = vmul.f32 %v857, 0.25
        %v866 = vlaneseq
        %v867 = vshrl.u32 %v866, 7
        %v868 = vsub.s32 0, %v867
        %v869 = vrot.slane %v684, %v868
        %v870 = vlaneseq
        %v871 = vshrl.u32 %v870, 7
        %v872 = vsub.s32 0, %v871
        %v873 = vrot.slane %v685, %v872
        %v876 = vadd.f32 %v862, %v869
        %v877 = vadd.f32 %v863, %v873
        %vm878 = vcmask 64512
        %v879 = vsel %vm878, %v876, -inf
        %880 = vmax.xlane.f32.xlu0 %v879
        %v881 = vpop.xlane.xlu0 %880
        %v882 = vsel %vm878, %v877, -inf
        %883 = vmax.xlane.f32.xlu0 %v882
        %v884 = vpop.xlane.xlu0 %883
        %v885 = vsub.f32 %v876, %v881
        %v886 = vsub.f32 %v877, %v884
        %v887 = vmul.f32 %v885, 1.442695
        %v888 = vpow.pop %v887
        %v889 = vmul.f32 %v886, 1.442695
        %v890 = vpow.pop %v889
        %v891 = vsel %vm878, %v888, 0.0
        %892 = vadd.xlane.f32.xlu0 %v891
        %v893 = vpop.xlane.xlu0 %892
        %v894 = vsel %vm878, %v890, 0.0
        %895 = vadd.xlane.f32.xlu0 %v894
        %v896 = vpop.xlane.xlu0 %895
        %v897 = vrcp.pop %v893
        %v898 = vmul.f32 %v888, %v897
        %v899 = vrcp.pop %v896
        %v900 = vmul.f32 %v890, %v899
        %v901 = vpack.c.bf16 %v898, %v898
        %v902 = vpack.c.bf16 %v900, %v900
        %903 = vrot.lane.b32.xlu0 %v761, 64
        %v904 = vpop.permute.xlu0 %903
        %v906 = vsel %vm878, %v901, 0
        %vm908 = vcmask 1043456
        %v910 = vsel %vm908, %v904, 0
        %912 = vmatprep.subr.bf16.mxu0 0
        %913 = vmatpush1.bf16.msra.mxu0 %v910
        %914 = vmatprep.subr.bf16.mxu0 0
        %915 = vmatpush1.bf16.msra.mxu0 0
        %916 = vmatprep.subr.bf16.mxu0 0
        %917 = vmatpush1.bf16.msra.mxu0 0
        %918 = vmatprep.subr.bf16.mxu0 0
        %919 = vmatpush1.bf16.msra.mxu0 0
        %920 = vmatprep.subr.bf16.mxu0 0
        %921 = vmatpush1.bf16.msra.mxu0 0
        %922 = vmatprep.subr.bf16.mxu0 0
        %923 = vmatpush1.bf16.msra.mxu0 0
        %924 = vmatprep.subr.bf16.mxu0 0
        %925 = vmatpush1.bf16.msra.mxu0 0
        %926 = vmatprep.subr.bf16.mxu0 0
        %927 = vmatpush1.bf16.msra.mxu0 0
        %928 = vmatprep.subr.bf16.mxu0 0
        %929 = vmatpush1.bf16.msra.mxu0 0
        %930 = vmatprep.subr.bf16.mxu0 0
        %931 = vmatpush1.bf16.msra.mxu0 0
        %932 = vmatprep.subr.bf16.mxu0 0
        %933 = vmatpush1.bf16.msra.mxu0 0
        %934 = vmatprep.subr.bf16.mxu0 0
        %935 = vmatpush1.bf16.msra.mxu0 0
        %936 = vmatprep.subr.bf16.mxu0 0
        %937 = vmatpush1.bf16.msra.mxu0 0
        %938 = vmatprep.subr.bf16.mxu0 0
        %939 = vmatpush1.bf16.msra.mxu0 0
        %940 = vmatprep.subr.bf16.mxu0 0
        %941 = vmatpush1.bf16.msra.mxu0 0
        %942 = vmatprep.subr.bf16.mxu0 0
        %943 = vmatpush1.bf16.msra.mxu0 0
        %944 = vmatprep.mubr.bf16.mxu0 0
        %945 = vmatmul.mubr.bf16.gmra.mrb[0].mxu0 %v906
        %v946 = vpop.f32.mrb[0].mxu0
        %v947 = vadd.f32 0.0, %v946
        %v948 = vpop.f32.mrb[0].mxu0
        %v949 = vpop.f32.mrb[0].mxu0
        %v950 = vpop.f32.mrb[0].mxu0
        %951 = vdwg.mxu0
        %952 = vrot.lane.b32.xlu0 %v762, 64
        %v953 = vpop.permute.xlu0 %952
        %v955 = vsel %vm878, %v902, 0
        %v958 = vsel %vm908, %v953, 0
        %960 = vmatprep.subr.bf16.mxu0 0
        %961 = vmatpush1.bf16.msra.mxu0 %v958
        %962 = vmatprep.subr.bf16.mxu0 0
        %963 = vmatpush1.bf16.msra.mxu0 0
        %964 = vmatprep.subr.bf16.mxu0 0
        %965 = vmatpush1.bf16.msra.mxu0 0
        %966 = vmatprep.subr.bf16.mxu0 0
        %967 = vmatpush1.bf16.msra.mxu0 0
        %968 = vmatprep.subr.bf16.mxu0 0
        %969 = vmatpush1.bf16.msra.mxu0 0
        %970 = vmatprep.subr.bf16.mxu0 0
        %971 = vmatpush1.bf16.msra.mxu0 0
        %972 = vmatprep.subr.bf16.mxu0 0
        %973 = vmatpush1.bf16.msra.mxu0 0
        %974 = vmatprep.subr.bf16.mxu0 0
        %975 = vmatpush1.bf16.msra.mxu0 0
        %976 = vmatprep.subr.bf16.mxu0 0
        %977 = vmatpush1.bf16.msra.mxu0 0
        %978 = vmatprep.subr.bf16.mxu0 0
        %979 = vmatpush1.bf16.msra.mxu0 0
        %980 = vmatprep.subr.bf16.mxu0 0
        %981 = vmatpush1.bf16.msra.mxu0 0
        %982 = vmatprep.subr.bf16.mxu0 0
        %983 = vmatpush1.bf16.msra.mxu0 0
        %984 = vmatprep.subr.bf16.mxu0 0
        %985 = vmatpush1.bf16.msra.mxu0 0
        %986 = vmatprep.subr.bf16.mxu0 0
        %987 = vmatpush1.bf16.msra.mxu0 0
        %988 = vmatprep.subr.bf16.mxu0 0
        %989 = vmatpush1.bf16.msra.mxu0 0
        %990 = vmatprep.subr.bf16.mxu0 0
        %991 = vmatpush1.bf16.msra.mxu0 0
        %992 = vmatprep.mubr.bf16.mxu0 0
        %993 = vmatmul.mubr.bf16.gmra.mrb[0].mxu0 %v955
        %v994 = vpop.f32.mrb[0].mxu0
        %v995 = vadd.f32 0.0, %v994
        %v996 = vpop.f32.mrb[0].mxu0
        %v997 = vpop.f32.mrb[0].mxu0
        %v998 = vpop.f32.mrb[0].mxu0
        %999 = vdwg.mxu0
        %v1000 = vpack.c.bf16 %v995, %v947
        %1001 = vrot.lane.b32.xlu0 %v761, 112
        %v1002 = vpop.permute.xlu0 %1001
        %1003 = vrot.lane.b32.xlu0 %v761, 80
        %v1004 = vpop.permute.xlu0 %1003
        %v1006 = vsel %vm766, %v1002, 0
        %v1009 = vsel %vm766, %v1004, 0
        %1011 = vmatprep.subr.bf16.mxu0 0
        %1012 = vmatpush1.bf16.xpose.msra.mxu0 %v1009
        %1013 = vmatprep.subr.bf16.mxu0 0
        %1014 = vmatpush1.bf16.xpose.msra.mxu0 0
        %1015 = vmatprep.subr.bf16.mxu0 0
        %1016 = vmatpush1.bf16.xpose.msra.mxu0 0
        %1017 = vmatprep.subr.bf16.mxu0 0
        %1018 = vmatpush1.bf16.xpose.msra.mxu0 0
        %1019 = vmatprep.subr.bf16.mxu0 0
        %1020 = vmatpush1.bf16.xpose.msra.mxu0 0
        %1021 = vmatprep.subr.bf16.mxu0 0
        %1022 = vmatpush1.bf16.xpose.msra.mxu0 0
        %1023 = vmatprep.subr.bf16.mxu0 0
        %1024 = vmatpush1.bf16.xpose.msra.mxu0 0
        %1025 = vmatprep.subr.bf16.mxu0 0
        %1026 = vmatpush1.bf16.xpose.msra.mxu0 0
        %1027 = vmatprep.subr.bf16.mxu0 0
        %1028 = vmatpush1.bf16.xpose.msra.mxu0 0
        %1029 = vmatprep.subr.bf16.mxu0 0
        %1030 = vmatpush1.bf16.xpose.msra.mxu0 0
        %1031 = vmatprep.subr.bf16.mxu0 0
        %1032 = vmatpush1.bf16.xpose.msra.mxu0 0
        %1033 = vmatprep.subr.bf16.mxu0 0
        %1034 = vmatpush1.bf16.xpose.msra.mxu0 0
        %1035 = vmatprep.subr.bf16.mxu0 0
        %1036 = vmatpush1.bf16.xpose.msra.mxu0 0
        %1037 = vmatprep.subr.bf16.mxu0 0
        %1038 = vmatpush1.bf16.xpose.msra.mxu0 0
        %1039 = vmatprep.subr.bf16.mxu0 0
        %1040 = vmatpush1.bf16.xpose.msra.mxu0 0
        %1041 = vmatprep.subr.bf16.mxu0 0
        %1042 = vmatpush1.bf16.xpose.msra.mxu0 0
        %1043 = vmatprep.mubr.bf16.mxu0 0
        %1044 = vmatmul.mubr.bf16.gmra.mrb[0].mxu0 %v1006
        %v1045 = vpop.f32.mrb[0].mxu0
        %v1046 = vadd.f32 0.0, %v1045
        %v1047 = vpop.f32.mrb[0].mxu0
        %v1048 = vpop.f32.mrb[0].mxu0
        %v1049 = vpop.f32.mrb[0].mxu0
        %1050 = vdwg.mxu0
        %1051 = vrot.lane.b32.xlu0 %v762, 112
        %v1052 = vpop.permute.xlu0 %1051
        %1053 = vrot.lane.b32.xlu0 %v762, 80
        %v1054 = vpop.permute.xlu0 %1053
        %v1056 = vsel %vm766, %v1052, 0
        %v1059 = vsel %vm766, %v1054, 0
        %1061 = vmatprep.subr.bf16.mxu0 0
        %1062 = vmatpush1.bf16.xpose.msra.mxu0 %v1059
        %1063 = vmatprep.subr.bf16.mxu0 0
        %1064 = vmatpush1.bf16.xpose.msra.mxu0 0
        %1065 = vmatprep.subr.bf16.mxu0 0
        %1066 = vmatpush1.bf16.xpose.msra.mxu0 0
        %1067 = vmatprep.subr.bf16.mxu0 0
        %1068 = vmatpush1.bf16.xpose.msra.mxu0 0
        %1069 = vmatprep.subr.bf16.mxu0 0
        %1070 = vmatpush1.bf16.xpose.msra.mxu0 0
        %1071 = vmatprep.subr.bf16.mxu0 0
        %1072 = vmatpush1.bf16.xpose.msra.mxu0 0
        %1073 = vmatprep.subr.bf16.mxu0 0
        %1074 = vmatpush1.bf16.xpose.msra.mxu0 0
        %1075 = vmatprep.subr.bf16.mxu0 0
        %1076 = vmatpush1.bf16.xpose.msra.mxu0 0
        %1077 = vmatprep.subr.bf16.mxu0 0
        %1078 = vmatpush1.bf16.xpose.msra.mxu0 0
        %1079 = vmatprep.subr.bf16.mxu0 0
        %1080 = vmatpush1.bf16.xpose.msra.mxu0 0
        %1081 = vmatprep.subr.bf16.mxu0 0
        %1082 = vmatpush1.bf16.xpose.msra.mxu0 0
        %1083 = vmatprep.subr.bf16.mxu0 0
        %1084 = vmatpush1.bf16.xpose.msra.mxu0 0
        %1085 = vmatprep.subr.bf16.mxu0 0
        %1086 = vmatpush1.bf16.xpose.msra.mxu0 0
        %1087 = vmatprep.subr.bf16.mxu0 0
        %1088 = vmatpush1.bf16.xpose.msra.mxu0 0
        %1089 = vmatprep.subr.bf16.mxu0 0
        %1090 = vmatpush1.bf16.xpose.msra.mxu0 0
        %1091 = vmatprep.subr.bf16.mxu0 0
        %1092 = vmatpush1.bf16.xpose.msra.mxu0 0
        %1093 = vmatprep.mubr.bf16.mxu0 0
        %1094 = vmatmul.mubr.bf16.gmra.mrb[0].mxu0 %v1056
        %v1095 = vpop.f32.mrb[0].mxu0
        %v1096 = vadd.f32 0.0, %v1095
        %v1097 = vpop.f32.mrb[0].mxu0
        %v1098 = vpop.f32.mrb[0].mxu0
        %v1099 = vpop.f32.mrb[0].mxu0
        %1100 = vdwg.mxu0
        %v1101 = vmul.f32 %v1046, 0.25
        %v1102 = vmul.f32 %v1096, 0.25
        %v1103 = vadd.f32 %v1101, %v869
        %v1104 = vadd.f32 %v1102, %v873
        %v1105 = vsel %vm878, %v1103, -inf
        %1106 = vmax.xlane.f32.xlu0 %v1105
        %v1107 = vpop.xlane.xlu0 %1106
        %v1108 = vsel %vm878, %v1104, -inf
        %1109 = vmax.xlane.f32.xlu0 %v1108
        %v1110 = vpop.xlane.xlu0 %1109
        %v1111 = vsub.f32 %v1103, %v1107
        %v1112 = vsub.f32 %v1104, %v1110
        %v1113 = vmul.f32 %v1111, 1.442695
        %v1114 = vpow.pop %v1113
        %v1115 = vmul.f32 %v1112, 1.442695
        %v1116 = vpow.pop %v1115
        %v1117 = vsel %vm878, %v1114, 0.0
        %1118 = vadd.xlane.f32.xlu0 %v1117
        %v1119 = vpop.xlane.xlu0 %1118
        %v1120 = vsel %vm878, %v1116, 0.0
        %1121 = vadd.xlane.f32.xlu0 %v1120
        %v1122 = vpop.xlane.xlu0 %1121
        %v1123 = vrcp.pop %v1119
        %v1124 = vmul.f32 %v1114, %v1123
        %v1125 = vrcp.pop %v1122
        %v1126 = vmul.f32 %v1116, %v1125
        %v1127 = vpack.c.bf16 %v1124, %v1124
        %v1128 = vpack.c.bf16 %v1126, %v1126
        %1129 = vrot.lane.b32.xlu0 %v761, 48
        %v1130 = vpop.permute.xlu0 %1129
        %v1132 = vsel %vm878, %v1127, 0
        %v1135 = vsel %vm908, %v1130, 0
        %1137 = vmatprep.subr.bf16.mxu0 0
        %1138 = vmatpush1.bf16.msra.mxu0 %v1135
        %1139 = vmatprep.subr.bf16.mxu0 0
        %1140 = vmatpush1.bf16.msra.mxu0 0
        %1141 = vmatprep.subr.bf16.mxu0 0
        %1142 = vmatpush1.bf16.msra.mxu0 0
        %1143 = vmatprep.subr.bf16.mxu0 0
        %1144 = vmatpush1.bf16.msra.mxu0 0
        %1145 = vmatprep.subr.bf16.mxu0 0
        %1146 = vmatpush1.bf16.msra.mxu0 0
        %1147 = vmatprep.subr.bf16.mxu0 0
        %1148 = vmatpush1.bf16.msra.mxu0 0
        %1149 = vmatprep.subr.bf16.mxu0 0
        %1150 = vmatpush1.bf16.msra.mxu0 0
        %1151 = vmatprep.subr.bf16.mxu0 0
        %1152 = vmatpush1.bf16.msra.mxu0 0
        %1153 = vmatprep.subr.bf16.mxu0 0
        %1154 = vmatpush1.bf16.msra.mxu0 0
        %1155 = vmatprep.subr.bf16.mxu0 0
        %1156 = vmatpush1.bf16.msra.mxu0 0
        %1157 = vmatprep.subr.bf16.mxu0 0
        %1158 = vmatpush1.bf16.msra.mxu0 0
        %1159 = vmatprep.subr.bf16.mxu0 0
        %1160 = vmatpush1.bf16.msra.mxu0 0
        %1161 = vmatprep.subr.bf16.mxu0 0
        %1162 = vmatpush1.bf16.msra.mxu0 0
        %1163 = vmatprep.subr.bf16.mxu0 0
        %1164 = vmatpush1.bf16.msra.mxu0 0
        %1165 = vmatprep.subr.bf16.mxu0 0
        %1166 = vmatpush1.bf16.msra.mxu0 0
        %1167 = vmatprep.subr.bf16.mxu0 0
        %1168 = vmatpush1.bf16.msra.mxu0 0
        %1169 = vmatprep.mubr.bf16.mxu0 0
        %1170 = vmatmul.mubr.bf16.gmra.mrb[0].mxu0 %v1132
        %v1171 = vpop.f32.mrb[0].mxu0
        %v1172 = vadd.f32 0.0, %v1171
        %v1173 = vpop.f32.mrb[0].mxu0
        %v1174 = vpop.f32.mrb[0].mxu0
        %v1175 = vpop.f32.mrb[0].mxu0
        %1176 = vdwg.mxu0
        %1177 = vrot.lane.b32.xlu0 %v762, 48
        %v1178 = vpop.permute.xlu0 %1177
        %v1180 = vsel %vm878, %v1128, 0
        %v1183 = vsel %vm908, %v1178, 0
        %1185 = vmatprep.subr.bf16.mxu0 0
        %1186 = vmatpush1.bf16.msra.mxu0 %v1183
        %1187 = vmatprep.subr.bf16.mxu0 0
        %1188 = vmatpush1.bf16.msra.mxu0 0
        %1189 = vmatprep.subr.bf16.mxu0 0
        %1190 = vmatpush1.bf16.msra.mxu0 0
        %1191 = vmatprep.subr.bf16.mxu0 0
        %1192 = vmatpush1.bf16.msra.mxu0 0
        %1193 = vmatprep.subr.bf16.mxu0 0
        %1194 = vmatpush1.bf16.msra.mxu0 0
        %1195 = vmatprep.subr.bf16.mxu0 0
        %1196 = vmatpush1.bf16.msra.mxu0 0
        %1197 = vmatprep.subr.bf16.mxu0 0
        %1198 = vmatpush1.bf16.msra.mxu0 0
        %1199 = vmatprep.subr.bf16.mxu0 0
        %1200 = vmatpush1.bf16.msra.mxu0 0
        %1201 = vmatprep.subr.bf16.mxu0 0
        %1202 = vmatpush1.bf16.msra.mxu0 0
        %1203 = vmatprep.subr.bf16.mxu0 0
        %1204 = vmatpush1.bf16.msra.mxu0 0
        %1205 = vmatprep.subr.bf16.mxu0 0
        %1206 = vmatpush1.bf16.msra.mxu0 0
        %1207 = vmatprep.subr.bf16.mxu0 0
        %1208 = vmatpush1.bf16.msra.mxu0 0
        %1209 = vmatprep.subr.bf16.mxu0 0
        %1210 = vmatpush1.bf16.msra.mxu0 0
        %1211 = vmatprep.subr.bf16.mxu0 0
        %1212 = vmatpush1.bf16.msra.mxu0 0
        %1213 = vmatprep.subr.bf16.mxu0 0
        %1214 = vmatpush1.bf16.msra.mxu0 0
        %1215 = vmatprep.subr.bf16.mxu0 0
        %1216 = vmatpush1.bf16.msra.mxu0 0
        %1217 = vmatprep.mubr.bf16.mxu0 0
        %1218 = vmatmul.mubr.bf16.gmra.mrb[0].mxu0 %v1180
        %v1219 = vpop.f32.mrb[0].mxu0
        %v1220 = vadd.f32 0.0, %v1219
        %v1221 = vpop.f32.mrb[0].mxu0
        %v1222 = vpop.f32.mrb[0].mxu0
        %v1223 = vpop.f32.mrb[0].mxu0
        %1224 = vdwg.mxu0
        %v1225 = vpack.c.bf16 %v1220, %v1172
        %v1228 = vunpack.c.l.b16 %v759
        %v1229 = vunpack.c.l.b16 %v760
        %v1230 = vpack.c.b16 %v1229, %v1228
        %v1233 = vsel %vm766, %v1225, 0
        %1235 = vmatprep.subr.bf16.mxu0 0
        %1236 = vmatpush1.bf16.msra.mxu0 %v1230
        %1237 = vmatprep.subr.bf16.mxu0 0
        %1238 = vmatpush1.bf16.msra.mxu0 0
        %1239 = vmatprep.subr.bf16.mxu0 0
        %1240 = vmatpush1.bf16.msra.mxu0 0
        %1241 = vmatprep.subr.bf16.mxu0 0
        %1242 = vmatpush1.bf16.msra.mxu0 0
        %1243 = vmatprep.subr.bf16.mxu0 0
        %1244 = vmatpush1.bf16.msra.mxu0 0
        %1245 = vmatprep.subr.bf16.mxu0 0
        %1246 = vmatpush1.bf16.msra.mxu0 0
        %1247 = vmatprep.subr.bf16.mxu0 0
        %1248 = vmatpush1.bf16.msra.mxu0 0
        %1249 = vmatprep.subr.bf16.mxu0 0
        %1250 = vmatpush1.bf16.msra.mxu0 0
        %1251 = vmatprep.subr.bf16.mxu0 0
        %1252 = vmatpush1.bf16.msra.mxu0 0
        %1253 = vmatprep.subr.bf16.mxu0 0
        %1254 = vmatpush1.bf16.msra.mxu0 0
        %1255 = vmatprep.subr.bf16.mxu0 0
        %1256 = vmatpush1.bf16.msra.mxu0 0
        %1257 = vmatprep.subr.bf16.mxu0 0
        %1258 = vmatpush1.bf16.msra.mxu0 0
        %1259 = vmatprep.subr.bf16.mxu0 0
        %1260 = vmatpush1.bf16.msra.mxu0 0
        %1261 = vmatprep.subr.bf16.mxu0 0
        %1262 = vmatpush1.bf16.msra.mxu0 0
        %1263 = vmatprep.subr.bf16.mxu0 0
        %1264 = vmatpush1.bf16.msra.mxu0 0
        %1265 = vmatprep.subr.bf16.mxu0 0
        %1266 = vmatpush1.bf16.msra.mxu0 0
        %1267 = vmatprep.mubr.bf16.mxu0 0
        %1268 = vmatmul.mubr.bf16.gmra.mrb[0].mxu0 %v1233
        %v1269 = vpop.f32.mrb[0].mxu0
        %v1270 = vadd.f32 0.0, %v1269
        %v1271 = vpop.f32.mrb[0].mxu0
        %v1272 = vpop.f32.mrb[0].mxu0
        %v1273 = vadd.f32 0.0, %v1272
        %v1274 = vpop.f32.mrb[0].mxu0
        %1275 = vdwg.mxu0
        %v1278 = vunpack.c.l.b16 %v757
        %v1279 = vunpack.c.l.b16 %v758
        %v1280 = vpack.c.b16 %v1279, %v1278
        %v1283 = vsel %vm766, %v1000, 0
        %1285 = vmatprep.subr.bf16.mxu0 0
        %1286 = vmatpush1.bf16.msra.mxu0 %v1280
        %1287 = vmatprep.subr.bf16.mxu0 0
        %1288 = vmatpush1.bf16.msra.mxu0 0
        %1289 = vmatprep.subr.bf16.mxu0 0
        %1290 = vmatpush1.bf16.msra.mxu0 0
        %1291 = vmatprep.subr.bf16.mxu0 0
        %1292 = vmatpush1.bf16.msra.mxu0 0
        %1293 = vmatprep.subr.bf16.mxu0 0
        %1294 = vmatpush1.bf16.msra.mxu0 0
        %1295 = vmatprep.subr.bf16.mxu0 0
        %1296 = vmatpush1.bf16.msra.mxu0 0
        %1297 = vmatprep.subr.bf16.mxu0 0
        %1298 = vmatpush1.bf16.msra.mxu0 0
        %1299 = vmatprep.subr.bf16.mxu0 0
        %1300 = vmatpush1.bf16.msra.mxu0 0
        %1301 = vmatprep.subr.bf16.mxu0 0
        %1302 = vmatpush1.bf16.msra.mxu0 0
        %1303 = vmatprep.subr.bf16.mxu0 0
        %1304 = vmatpush1.bf16.msra.mxu0 0
        %1305 = vmatprep.subr.bf16.mxu0 0
        %1306 = vmatpush1.bf16.msra.mxu0 0
        %1307 = vmatprep.subr.bf16.mxu0 0
        %1308 = vmatpush1.bf16.msra.mxu0 0
        %1309 = vmatprep.subr.bf16.mxu0 0
        %1310 = vmatpush1.bf16.msra.mxu0 0
        %1311 = vmatprep.subr.bf16.mxu0 0
        %1312 = vmatpush1.bf16.msra.mxu0 0
        %1313 = vmatprep.subr.bf16.mxu0 0
        %1314 = vmatpush1.bf16.msra.mxu0 0
        %1315 = vmatprep.subr.bf16.mxu0 0
        %1316 = vmatpush1.bf16.msra.mxu0 0
        %1317 = vmatprep.mubr.bf16.mxu0 0
        %1318 = vmatmul.mubr.bf16.gmra.mrb[0].mxu0 %v1283
        %v1319 = vpop.f32.mrb[0].mxu0
        %v1320 = vadd.f32 %v1270, %v1319
        %v1321 = vpop.f32.mrb[0].mxu0
        %v1322 = vpop.f32.mrb[0].mxu0
        %v1323 = vadd.f32 %v1273, %v1322
        %v1324 = vpop.f32.mrb[0].mxu0
        %1325 = vdwg.mxu0
        %v1326 = vlaneseq
        %v1327 = vshrl.u32 %v1326, 7
        %v1328 = vsub.s32 0, %v1327
        %v1329 = vrot.slane %v688, %v1328
        %v1330 = vadd.f32 %v1320, %v1329
        %v1331 = vadd.f32 %v1323, %v1329
        %v1332 = vadd.f32 %v1330, %v681
        %v1333 = vadd.f32 %v1331, %v682
        %v1334 = vsel %vm712, %v1332, 0.0
        %1335 = vadd.xlane.f32.xlu0 %v1334
        %v1336 = vpop.xlane.xlu0 %1335
        %v1337 = vsel %vm712, %v1333, 0.0
        %1338 = vadd.xlane.f32.xlu0 %v1337
        %v1339 = vpop.xlane.xlu0 %1338
        %v1340 = vrcp.pop 32.0
        %v1341 = vmul.f32 %v1336, %v1340
        %v1342 = vmul.f32 %v1339, %v1340
        %v1343 = vsub.f32 %v1332, %v1341
        %v1344 = vsub.f32 %v1333, %v1342
        %v1345 = vmul.f32 %v1343, %v1343
        %v1346 = vmul.f32 %v1344, %v1344
        %v1347 = vsel %vm712, %v1345, 0.0
        %1348 = vadd.xlane.f32.xlu0 %v1347
        %v1349 = vpop.xlane.xlu0 %1348
        %v1350 = vsel %vm712, %v1346, 0.0
        %1351 = vadd.xlane.f32.xlu0 %v1350
        %v1352 = vpop.xlane.xlu0 %1351
        %v1353 = vmul.f32 %v1349, %v1340
        %v1354 = vmul.f32 %v1352, %v1340
        %v1355 = vadd.f32 %v1353, 1e-05
        %v1356 = vadd.f32 %v1354, 1e-05
        %v1357 = vrsqrt.pop %v1355
        %v1358 = vrsqrt.pop %v1356
        %v1359 = vmul.f32 %v1343, %v1357
        %v1360 = vmul.f32 %v1344, %v1358
        %v1361 = vlaneseq
        %v1362 = vshrl.u32 %v1361, 7
        %v1363 = vsub.s32 1, %v1362
        %v1364 = vrot.slane %v688, %v1363
        %v1365 = vmul.f32 %v1359, %v1364
        %v1366 = vmul.f32 %v1360, %v1364
        %v1367 = vlaneseq
        %v1368 = vshrl.u32 %v1367, 7
        %v1369 = vsub.s32 2, %v1368
        %v1370 = vrot.slane %v688, %v1369
        %v1371 = vadd.f32 %v1365, %v1370
        %v1372 = vadd.f32 %v1366, %v1370
        %1374 = vset.pattern.permute.xlu0 0
        %1375 = vperm.xlu0 %1374, %v686
        %v1376 = vpop.permute.xlu0 %1375
        %1379 = vset.pattern.permute.xlu0 0
        %1380 = vperm.xlu0 %1379, %v687
        %v1381 = vpop.permute.xlu0 %1380
        %v1383 = vmul.f32 %v1371, %v1376
        %v1384 = vmul.f32 %v1372, %v1381
        %v1385 = vlaneseq
        %v1386 = vshrl.u32 %v1385, 7
        %v1387 = vadd.s32 %v1386, 8
        %vm1388 = vcmp.lt.s32.totalorder %v1386, 0
        %v1389 = vsub.s32 0, %v1386
        %v1390 = vsel %vm1388, %v1389, %v1386
        %v1391 = vshrl.u32 %v1390, 3
        %v1392 = vand.u32 %v1390, 7
        %v1393 = vsub.s32 0, %v1392
        %v1394 = vsel %vm1388, %v1393, %v1392
        %vm1395 = vcmp.lt.s32.totalorder %v1387, 0
        %v1396 = vsub.s32 0, %v1387
        %v1397 = vsel %vm1395, %v1396, %v1387
        %v1398 = vshrl.u32 %v1397, 3
        %v1399 = vand.u32 %v1397, 7
        %v1400 = vsub.s32 0, %v1399
        %v1401 = vsel %vm1395, %v1400, %v1399
        %vm1402 = vcmp.ne.s32.totalorder %v1394, 0
        %vm1403 = vcmp.ne.s32.totalorder %v1401, 0
        %vm1404 = vcmp.lt.s32.totalorder %v1394, 0
        %vm1405 = vcmp.lt.s32.totalorder %v1401, 0
        %vm1406 = vmand %vm1404, %vm1402
        %vm1407 = vmand %vm1405, %vm1403
        %v1408 = vadd.s32 %v1394, 8
        %v1409 = vadd.s32 %v1401, 8
        %v1410 = vsel %vm1406, %v1408, %v1394
        %v1411 = vsel %vm1407, %v1409, %v1401
        %v1412 = vld [vmem:[%s590] sm:$0xf]
        %v1413 = vld [vmem:[%s590 + $0x4] sm:$0xf]
        %v1414 = vld [vmem:[%s590 + $0x8] sm:$0xf]
        %v1415 = vld [vmem:[%s590 + $0xc] sm:$0xf]
        %v1416 = vld [vmem:[%s590 + $0x10] sm:$0xf]
        %v1417 = vld [vmem:[%s590 + $0x14] sm:$0xf]
        %v1418 = vld [vmem:[%s590 + $0x18] sm:$0xf]
        %v1419 = vld [vmem:[%s590 + $0x1c] sm:$0xf]
        %v1420 = vld [vmem:[%s590 + $0x20] sm:$0xf]
        %v1421 = vld [vmem:[%s590 + $0x24] sm:$0xf]
        %v1422 = vld [vmem:[%s590 + $0x28] sm:$0xf]
        %v1423 = vld [vmem:[%s590 + $0x2c] sm:$0xf]
        %v1424 = vld [vmem:[%s590 + $0x30] sm:$0xf]
        %v1425 = vld [vmem:[%s590 + $0x34] sm:$0xf]
        %v1426 = vld [vmem:[%s590 + $0x38] sm:$0xf]
        %v1427 = vld [vmem:[%s590 + $0x3c] sm:$0xf]
        %v1428 = vld [vmem:[%s590 + $0x40] sm:$0xf]
        %v1429 = vld [vmem:[%s590 + $0x44] sm:$0xf]
        %v1430 = vld [vmem:[%s590 + $0x48] sm:$0xf]
        %v1431 = vld [vmem:[%s590 + $0x4c] sm:$0xf]
        %v1432 = vld [vmem:[%s590 + $0x50] sm:$0xf]
        %v1433 = vld [vmem:[%s590 + $0x54] sm:$0xf]
        %v1434 = vld [vmem:[%s590 + $0x58] sm:$0xf]
        %v1435 = vld [vmem:[%s590 + $0x5c] sm:$0xf]
        %v1436 = vld [vmem:[%s590 + $0x60] sm:$0xf]
        %v1437 = vld [vmem:[%s590 + $0x64] sm:$0xf]
        %v1438 = vld [vmem:[%s590 + $0x68] sm:$0xf]
        %v1439 = vld [vmem:[%s590 + $0x6c] sm:$0xf]
        %v1440 = vld [vmem:[%s590 + $0x70] sm:$0xf]
        %v1441 = vld [vmem:[%s590 + $0x74] sm:$0xf]
        %v1442 = vld [vmem:[%s590 + $0x78] sm:$0xf]
        %v1443 = vld [vmem:[%s590 + $0x7c] sm:$0xf]
        %v1444 = vld [vmem:[%s590 + $0x80] sm:$0xf]
        %v1445 = vld [vmem:[%s590 + $0x84] sm:$0xf]
        %v1446 = vld [vmem:[%s590 + $0x88] sm:$0xf]
        %v1447 = vld [vmem:[%s590 + $0x8c] sm:$0xf]
        %v1448 = vrot.slane %v1383, 4
        %v1449 = vrot.slane %v1384, 4
        %vm1450 = vcmp.lt.s32.totalorder %v1386, 4
        %v1451 = vsel %vm1450, %v1448, %v1449
        %v1452 = vsel %vm1450, %v1449, %v1448
        %v1453 = vadd.s32 %v1410, 4294967292
        %v1454 = vadd.s32 %v1411, 4294967292
        %vm1455 = vcmp.ge.s32.totalorder %v1453, 0
        %vm1456 = vcmp.ge.s32.totalorder %v1454, 0
        %vm1457 = vcmp.lt.s32.totalorder %v1453, 8
        %vm1458 = vcmp.lt.s32.totalorder %v1454, 8
        %vm1459 = vmand %vm1455, %vm1457
        %vm1460 = vmand %vm1456, %vm1458
        %v1461 = vsel %vm1459, 1, 0
        %v1462 = vsel %vm1460, 1, 0
        %vm1463 = vcmp.eq.s32.totalorder %v1461, 1
        %vm1464 = vcmp.eq.s32.totalorder %v1462, 1
        %v1465 = vsel %vm1463, %v1452, 0.0
        %v1466 = vsel %vm1464, %v1451, 0.0
        %v1467 = vpack.c.bf16 %v1466, %v1465
        %v1468 = vrot.slane %v1383, 5
        %v1469 = vrot.slane %v1384, 5
        %vm1470 = vcmp.lt.s32.totalorder %v1386, 3
        %v1471 = vsel %vm1470, %v1468, %v1469
        %v1472 = vsel %vm1470, %v1469, %v1468
        %v1473 = vadd.s32 %v1410, 4294967293
        %v1474 = vadd.s32 %v1411, 4294967293
        %vm1475 = vcmp.ge.s32.totalorder %v1473, 0
        %vm1476 = vcmp.ge.s32.totalorder %v1474, 0
        %vm1477 = vcmp.lt.s32.totalorder %v1473, 8
        %vm1478 = vcmp.lt.s32.totalorder %v1474, 8
        %vm1479 = vmand %vm1475, %vm1477
        %vm1480 = vmand %vm1476, %vm1478
        %v1481 = vsel %vm1479, 1, 0
        %v1482 = vsel %vm1480, 1, 0
        %vm1483 = vcmp.eq.s32.totalorder %v1481, 1
        %vm1484 = vcmp.eq.s32.totalorder %v1482, 1
        %v1485 = vsel %vm1483, %v1472, 0.0
        %v1486 = vsel %vm1484, %v1471, 0.0
        %v1487 = vpack.c.bf16 %v1486, %v1485
        %v1492 = vunpack.c.l.b16 %v1416
        %v1493 = vunpack.c.l.b16 %v1417
        %v1494 = vunpack.c.l.b16 %v1418
        %v1495 = vunpack.c.l.b16 %v1419
        %v1496 = vpack.c.b16 %v1493, %v1492
        %v1497 = vpack.c.b16 %v1495, %v1494
        %v1501 = vsel %vm712, %v1487, 0
        %1503 = vmatprep.subr.bf16.mxu0 0
        %1504 = vmatpush1.bf16.msra.mxu0 %v1496
        %1505 = vmatprep.subr.bf16.mxu0 0
        %1506 = vmatpush1.bf16.msra.mxu0 %v1497
        %1507 = vmatprep.subr.bf16.mxu0 0
        %1508 = vmatpush1.bf16.msra.mxu0 0
        %1509 = vmatprep.subr.bf16.mxu0 0
        %1510 = vmatpush1.bf16.msra.mxu0 0
        %1511 = vmatprep.subr.bf16.mxu0 0
        %1512 = vmatpush1.bf16.msra.mxu0 0
        %1513 = vmatprep.subr.bf16.mxu0 0
        %1514 = vmatpush1.bf16.msra.mxu0 0
        %1515 = vmatprep.subr.bf16.mxu0 0
        %1516 = vmatpush1.bf16.msra.mxu0 0
        %1517 = vmatprep.subr.bf16.mxu0 0
        %1518 = vmatpush1.bf16.msra.mxu0 0
        %1519 = vmatprep.subr.bf16.mxu0 0
        %1520 = vmatpush1.bf16.msra.mxu0 0
        %1521 = vmatprep.subr.bf16.mxu0 0
        %1522 = vmatpush1.bf16.msra.mxu0 0
        %1523 = vmatprep.subr.bf16.mxu0 0
        %1524 = vmatpush1.bf16.msra.mxu0 0
        %1525 = vmatprep.subr.bf16.mxu0 0
        %1526 = vmatpush1.bf16.msra.mxu0 0
        %1527 = vmatprep.subr.bf16.mxu0 0
        %1528 = vmatpush1.bf16.msra.mxu0 0
        %1529 = vmatprep.subr.bf16.mxu0 0
        %1530 = vmatpush1.bf16.msra.mxu0 0
        %1531 = vmatprep.subr.bf16.mxu0 0
        %1532 = vmatpush1.bf16.msra.mxu0 0
        %1533 = vmatprep.subr.bf16.mxu0 0
        %1534 = vmatpush1.bf16.msra.mxu0 0
        %1535 = vmatprep.mubr.bf16.mxu0 0
        %1536 = vmatmul.mubr.bf16.gmra.mrb[0].mxu0 %v1501
        %v1537 = vpop.f32.mrb[0].mxu0
        %v1538 = vadd.f32 0.0, %v1537
        %v1539 = vpop.f32.mrb[0].mxu0
        %v1540 = vpop.f32.mrb[0].mxu0
        %v1541 = vadd.f32 0.0, %v1540
        %v1542 = vpop.f32.mrb[0].mxu0
        %1543 = vdwg.mxu0
        %v1548 = vunpack.c.l.b16 %v1412
        %v1549 = vunpack.c.l.b16 %v1413
        %v1550 = vunpack.c.l.b16 %v1414
        %v1551 = vunpack.c.l.b16 %v1415
        %v1552 = vpack.c.b16 %v1549, %v1548
        %v1553 = vpack.c.b16 %v1551, %v1550
        %v1557 = vsel %vm712, %v1467, 0
        %1559 = vmatprep.subr.bf16.mxu0 0
        %1560 = vmatpush1.bf16.msra.mxu0 %v1552
        %1561 = vmatprep.subr.bf16.mxu0 0
        %1562 = vmatpush1.bf16.msra.mxu0 %v1553
        %1563 = vmatprep.subr.bf16.mxu0 0
        %1564 = vmatpush1.bf16.msra.mxu0 0
        %1565 = vmatprep.subr.bf16.mxu0 0
        %1566 = vmatpush1.bf16.msra.mxu0 0
        %1567 = vmatprep.subr.bf16.mxu0 0
        %1568 = vmatpush1.bf16.msra.mxu0 0
        %1569 = vmatprep.subr.bf16.mxu0 0
        %1570 = vmatpush1.bf16.msra.mxu0 0
        %1571 = vmatprep.subr.bf16.mxu0 0
        %1572 = vmatpush1.bf16.msra.mxu0 0
        %1573 = vmatprep.subr.bf16.mxu0 0
        %1574 = vmatpush1.bf16.msra.mxu0 0
        %1575 = vmatprep.subr.bf16.mxu0 0
        %1576 = vmatpush1.bf16.msra.mxu0 0
        %1577 = vmatprep.subr.bf16.mxu0 0
        %1578 = vmatpush1.bf16.msra.mxu0 0
        %1579 = vmatprep.subr.bf16.mxu0 0
        %1580 = vmatpush1.bf16.msra.mxu0 0
        %1581 = vmatprep.subr.bf16.mxu0 0
        %1582 = vmatpush1.bf16.msra.mxu0 0
        %1583 = vmatprep.subr.bf16.mxu0 0
        %1584 = vmatpush1.bf16.msra.mxu0 0
        %1585 = vmatprep.subr.bf16.mxu0 0
        %1586 = vmatpush1.bf16.msra.mxu0 0
        %1587 = vmatprep.subr.bf16.mxu0 0
        %1588 = vmatpush1.bf16.msra.mxu0 0
        %1589 = vmatprep.subr.bf16.mxu0 0
        %1590 = vmatpush1.bf16.msra.mxu0 0
        %1591 = vmatprep.mubr.bf16.mxu0 0
        %1592 = vmatmul.mubr.bf16.gmra.mrb[0].mxu0 %v1557
        %v1593 = vpop.f32.mrb[0].mxu0
        %v1594 = vadd.f32 %v1538, %v1593
        %v1595 = vpop.f32.mrb[0].mxu0
        %v1596 = vpop.f32.mrb[0].mxu0
        %v1597 = vadd.f32 %v1541, %v1596
        %v1598 = vpop.f32.mrb[0].mxu0
        %1599 = vdwg.mxu0
        %v1600 = vrot.slane %v1383, 6
        %v1601 = vrot.slane %v1384, 6
        %vm1602 = vcmp.lt.s32.totalorder %v1386, 2
        %v1603 = vsel %vm1602, %v1600, %v1601
        %v1604 = vsel %vm1602, %v1601, %v1600
        %v1605 = vadd.s32 %v1410, 4294967294
        %v1606 = vadd.s32 %v1411, 4294967294
        %vm1607 = vcmp.ge.s32.totalorder %v1605, 0
        %vm1608 = vcmp.ge.s32.totalorder %v1606, 0
        %vm1609 = vcmp.lt.s32.totalorder %v1605, 8
        %vm1610 = vcmp.lt.s32.totalorder %v1606, 8
        %vm1611 = vmand %vm1607, %vm1609
        %vm1612 = vmand %vm1608, %vm1610
        %v1613 = vsel %vm1611, 1, 0
        %v1614 = vsel %vm1612, 1, 0
        %vm1615 = vcmp.eq.s32.totalorder %v1613, 1
        %vm1616 = vcmp.eq.s32.totalorder %v1614, 1
        %v1617 = vsel %vm1615, %v1604, 0.0
        %v1618 = vsel %vm1616, %v1603, 0.0
        %v1619 = vpack.c.bf16 %v1618, %v1617
        %v1624 = vunpack.c.l.b16 %v1420
        %v1625 = vunpack.c.l.b16 %v1421
        %v1626 = vunpack.c.l.b16 %v1422
        %v1627 = vunpack.c.l.b16 %v1423
        %v1628 = vpack.c.b16 %v1625, %v1624
        %v1629 = vpack.c.b16 %v1627, %v1626
        %v1633 = vsel %vm712, %v1619, 0
        %1635 = vmatprep.subr.bf16.mxu0 0
        %1636 = vmatpush1.bf16.msra.mxu0 %v1628
        %1637 = vmatprep.subr.bf16.mxu0 0
        %1638 = vmatpush1.bf16.msra.mxu0 %v1629
        %1639 = vmatprep.subr.bf16.mxu0 0
        %1640 = vmatpush1.bf16.msra.mxu0 0
        %1641 = vmatprep.subr.bf16.mxu0 0
        %1642 = vmatpush1.bf16.msra.mxu0 0
        %1643 = vmatprep.subr.bf16.mxu0 0
        %1644 = vmatpush1.bf16.msra.mxu0 0
        %1645 = vmatprep.subr.bf16.mxu0 0
        %1646 = vmatpush1.bf16.msra.mxu0 0
        %1647 = vmatprep.subr.bf16.mxu0 0
        %1648 = vmatpush1.bf16.msra.mxu0 0
        %1649 = vmatprep.subr.bf16.mxu0 0
        %1650 = vmatpush1.bf16.msra.mxu0 0
        %1651 = vmatprep.subr.bf16.mxu0 0
        %1652 = vmatpush1.bf16.msra.mxu0 0
        %1653 = vmatprep.subr.bf16.mxu0 0
        %1654 = vmatpush1.bf16.msra.mxu0 0
        %1655 = vmatprep.subr.bf16.mxu0 0
        %1656 = vmatpush1.bf16.msra.mxu0 0
        %1657 = vmatprep.subr.bf16.mxu0 0
        %1658 = vmatpush1.bf16.msra.mxu0 0
        %1659 = vmatprep.subr.bf16.mxu0 0
        %1660 = vmatpush1.bf16.msra.mxu0 0
        %1661 = vmatprep.subr.bf16.mxu0 0
        %1662 = vmatpush1.bf16.msra.mxu0 0
        %1663 = vmatprep.subr.bf16.mxu0 0
        %1664 = vmatpush1.bf16.msra.mxu0 0
        %1665 = vmatprep.subr.bf16.mxu0 0
        %1666 = vmatpush1.bf16.msra.mxu0 0
        %1667 = vmatprep.mubr.bf16.mxu0 0
        %1668 = vmatmul.mubr.bf16.gmra.mrb[0].mxu0 %v1633
        %v1669 = vpop.f32.mrb[0].mxu0
        %v1670 = vadd.f32 0.0, %v1669
        %v1671 = vpop.f32.mrb[0].mxu0
        %v1672 = vpop.f32.mrb[0].mxu0
        %v1673 = vadd.f32 0.0, %v1672
        %v1674 = vpop.f32.mrb[0].mxu0
        %1675 = vdwg.mxu0
        %v1676 = vadd.f32 %v1594, %v1670
        %v1677 = vadd.f32 %v1597, %v1673
        %v1678 = vrot.slane %v1383, 7
        %v1679 = vrot.slane %v1384, 7
        %vm1680 = vcmp.lt.s32.totalorder %v1386, 1
        %v1681 = vsel %vm1680, %v1678, %v1679
        %v1682 = vsel %vm1680, %v1679, %v1678
        %v1683 = vadd.s32 %v1410, 4294967295
        %v1684 = vadd.s32 %v1411, 4294967295
        %vm1685 = vcmp.ge.s32.totalorder %v1683, 0
        %vm1686 = vcmp.ge.s32.totalorder %v1684, 0
        %vm1687 = vcmp.lt.s32.totalorder %v1683, 8
        %vm1688 = vcmp.lt.s32.totalorder %v1684, 8
        %vm1689 = vmand %vm1685, %vm1687
        %vm1690 = vmand %vm1686, %vm1688
        %v1691 = vsel %vm1689, 1, 0
        %v1692 = vsel %vm1690, 1, 0
        %vm1693 = vcmp.eq.s32.totalorder %v1691, 1
        %vm1694 = vcmp.eq.s32.totalorder %v1692, 1
        %v1695 = vsel %vm1693, %v1682, 0.0
        %v1696 = vsel %vm1694, %v1681, 0.0
        %v1697 = vpack.c.bf16 %v1696, %v1695
        %v1702 = vunpack.c.l.b16 %v1424
        %v1703 = vunpack.c.l.b16 %v1425
        %v1704 = vunpack.c.l.b16 %v1426
        %v1705 = vunpack.c.l.b16 %v1427
        %v1706 = vpack.c.b16 %v1703, %v1702
        %v1707 = vpack.c.b16 %v1705, %v1704
        %v1711 = vsel %vm712, %v1697, 0
        %1713 = vmatprep.subr.bf16.mxu0 0
        %1714 = vmatpush1.bf16.msra.mxu0 %v1706
        %1715 = vmatprep.subr.bf16.mxu0 0
        %1716 = vmatpush1.bf16.msra.mxu0 %v1707
        %1717 = vmatprep.subr.bf16.mxu0 0
        %1718 = vmatpush1.bf16.msra.mxu0 0
        %1719 = vmatprep.subr.bf16.mxu0 0
        %1720 = vmatpush1.bf16.msra.mxu0 0
        %1721 = vmatprep.subr.bf16.mxu0 0
        %1722 = vmatpush1.bf16.msra.mxu0 0
        %1723 = vmatprep.subr.bf16.mxu0 0
        %1724 = vmatpush1.bf16.msra.mxu0 0
        %1725 = vmatprep.subr.bf16.mxu0 0
        %1726 = vmatpush1.bf16.msra.mxu0 0
        %1727 = vmatprep.subr.bf16.mxu0 0
        %1728 = vmatpush1.bf16.msra.mxu0 0
        %1729 = vmatprep.subr.bf16.mxu0 0
        %1730 = vmatpush1.bf16.msra.mxu0 0
        %1731 = vmatprep.subr.bf16.mxu0 0
        %1732 = vmatpush1.bf16.msra.mxu0 0
        %1733 = vmatprep.subr.bf16.mxu0 0
        %1734 = vmatpush1.bf16.msra.mxu0 0
        %1735 = vmatprep.subr.bf16.mxu0 0
        %1736 = vmatpush1.bf16.msra.mxu0 0
        %1737 = vmatprep.subr.bf16.mxu0 0
        %1738 = vmatpush1.bf16.msra.mxu0 0
        %1739 = vmatprep.subr.bf16.mxu0 0
        %1740 = vmatpush1.bf16.msra.mxu0 0
        %1741 = vmatprep.subr.bf16.mxu0 0
        %1742 = vmatpush1.bf16.msra.mxu0 0
        %1743 = vmatprep.subr.bf16.mxu0 0
        %1744 = vmatpush1.bf16.msra.mxu0 0
        %1745 = vmatprep.mubr.bf16.mxu0 0
        %1746 = vmatmul.mubr.bf16.gmra.mrb[0].mxu0 %v1711
        %v1747 = vpop.f32.mrb[0].mxu0
        %v1748 = vadd.f32 0.0, %v1747
        %v1749 = vpop.f32.mrb[0].mxu0
        %v1750 = vpop.f32.mrb[0].mxu0
        %v1751 = vadd.f32 0.0, %v1750
        %v1752 = vpop.f32.mrb[0].mxu0
        %1753 = vdwg.mxu0
        %v1754 = vadd.f32 %v1676, %v1748
        %v1755 = vadd.f32 %v1677, %v1751
        %vm1756 = vcmp.ge.s32.totalorder %v1410, 0
        %vm1757 = vcmp.ge.s32.totalorder %v1411, 0
        %vm1758 = vcmp.lt.s32.totalorder %v1410, 8
        %vm1759 = vcmp.lt.s32.totalorder %v1411, 8
        %vm1760 = vmand %vm1756, %vm1758
        %vm1761 = vmand %vm1757, %vm1759
        %v1762 = vsel %vm1760, 1, 0
        %v1763 = vsel %vm1761, 1, 0
        %vm1764 = vcmp.eq.s32.totalorder %v1762, 1
        %vm1765 = vcmp.eq.s32.totalorder %v1763, 1
        %v1766 = vsel %vm1764, %v1383, 0.0
        %v1767 = vsel %vm1765, %v1384, 0.0
        %v1768 = vpack.c.bf16 %v1767, %v1766
        %v1773 = vunpack.c.l.b16 %v1428
        %v1774 = vunpack.c.l.b16 %v1429
        %v1775 = vunpack.c.l.b16 %v1430
        %v1776 = vunpack.c.l.b16 %v1431
        %v1777 = vpack.c.b16 %v1774, %v1773
        %v1778 = vpack.c.b16 %v1776, %v1775
        %v1782 = vsel %vm712, %v1768, 0
        %1784 = vmatprep.subr.bf16.mxu0 0
        %1785 = vmatpush1.bf16.msra.mxu0 %v1777
        %1786 = vmatprep.subr.bf16.mxu0 0
        %1787 = vmatpush1.bf16.msra.mxu0 %v1778
        %1788 = vmatprep.subr.bf16.mxu0 0
        %1789 = vmatpush1.bf16.msra.mxu0 0
        %1790 = vmatprep.subr.bf16.mxu0 0
        %1791 = vmatpush1.bf16.msra.mxu0 0
        %1792 = vmatprep.subr.bf16.mxu0 0
        %1793 = vmatpush1.bf16.msra.mxu0 0
        %1794 = vmatprep.subr.bf16.mxu0 0
        %1795 = vmatpush1.bf16.msra.mxu0 0
        %1796 = vmatprep.subr.bf16.mxu0 0
        %1797 = vmatpush1.bf16.msra.mxu0 0
        %1798 = vmatprep.subr.bf16.mxu0 0
        %1799 = vmatpush1.bf16.msra.mxu0 0
        %1800 = vmatprep.subr.bf16.mxu0 0
        %1801 = vmatpush1.bf16.msra.mxu0 0
        %1802 = vmatprep.subr.bf16.mxu0 0
        %1803 = vmatpush1.bf16.msra.mxu0 0
        %1804 = vmatprep.subr.bf16.mxu0 0
        %1805 = vmatpush1.bf16.msra.mxu0 0
        %1806 = vmatprep.subr.bf16.mxu0 0
        %1807 = vmatpush1.bf16.msra.mxu0 0
        %1808 = vmatprep.subr.bf16.mxu0 0
        %1809 = vmatpush1.bf16.msra.mxu0 0
        %1810 = vmatprep.subr.bf16.mxu0 0
        %1811 = vmatpush1.bf16.msra.mxu0 0
        %1812 = vmatprep.subr.bf16.mxu0 0
        %1813 = vmatpush1.bf16.msra.mxu0 0
        %1814 = vmatprep.subr.bf16.mxu0 0
        %1815 = vmatpush1.bf16.msra.mxu0 0
        %1816 = vmatprep.mubr.bf16.mxu0 0
        %1817 = vmatmul.mubr.bf16.gmra.mrb[0].mxu0 %v1782
        %v1818 = vpop.f32.mrb[0].mxu0
        %v1819 = vadd.f32 0.0, %v1818
        %v1820 = vpop.f32.mrb[0].mxu0
        %v1821 = vpop.f32.mrb[0].mxu0
        %v1822 = vadd.f32 0.0, %v1821
        %v1823 = vpop.f32.mrb[0].mxu0
        %1824 = vdwg.mxu0
        %v1825 = vadd.f32 %v1754, %v1819
        %v1826 = vadd.f32 %v1755, %v1822
        %v1827 = vrot.slane %v1383, 1
        %v1828 = vrot.slane %v1384, 1
        %vm1829 = vcmp.lt.s32.totalorder %v1386, 7
        %v1830 = vsel %vm1829, %v1827, %v1828
        %v1831 = vsel %vm1829, %v1828, %v1827
        %v1832 = vadd.s32 %v1410, 1
        %v1833 = vadd.s32 %v1411, 1
        %vm1834 = vcmp.ge.s32.totalorder %v1832, 0
        %vm1835 = vcmp.ge.s32.totalorder %v1833, 0
        %vm1836 = vcmp.lt.s32.totalorder %v1832, 8
        %vm1837 = vcmp.lt.s32.totalorder %v1833, 8
        %vm1838 = vmand %vm1834, %vm1836
        %vm1839 = vmand %vm1835, %vm1837
        %v1840 = vsel %vm1838, 1, 0
        %v1841 = vsel %vm1839, 1, 0
        %vm1842 = vcmp.eq.s32.totalorder %v1840, 1
        %vm1843 = vcmp.eq.s32.totalorder %v1841, 1
        %v1844 = vsel %vm1842, %v1830, 0.0
        %v1845 = vsel %vm1843, %v1831, 0.0
        %v1846 = vpack.c.bf16 %v1845, %v1844
        %v1851 = vunpack.c.l.b16 %v1432
        %v1852 = vunpack.c.l.b16 %v1433
        %v1853 = vunpack.c.l.b16 %v1434
        %v1854 = vunpack.c.l.b16 %v1435
        %v1855 = vpack.c.b16 %v1852, %v1851
        %v1856 = vpack.c.b16 %v1854, %v1853
        %v1860 = vsel %vm712, %v1846, 0
        %1862 = vmatprep.subr.bf16.mxu0 0
        %1863 = vmatpush1.bf16.msra.mxu0 %v1855
        %1864 = vmatprep.subr.bf16.mxu0 0
        %1865 = vmatpush1.bf16.msra.mxu0 %v1856
        %1866 = vmatprep.subr.bf16.mxu0 0
        %1867 = vmatpush1.bf16.msra.mxu0 0
        %1868 = vmatprep.subr.bf16.mxu0 0
        %1869 = vmatpush1.bf16.msra.mxu0 0
        %1870 = vmatprep.subr.bf16.mxu0 0
        %1871 = vmatpush1.bf16.msra.mxu0 0
        %1872 = vmatprep.subr.bf16.mxu0 0
        %1873 = vmatpush1.bf16.msra.mxu0 0
        %1874 = vmatprep.subr.bf16.mxu0 0
        %1875 = vmatpush1.bf16.msra.mxu0 0
        %1876 = vmatprep.subr.bf16.mxu0 0
        %1877 = vmatpush1.bf16.msra.mxu0 0
        %1878 = vmatprep.subr.bf16.mxu0 0
        %1879 = vmatpush1.bf16.msra.mxu0 0
        %1880 = vmatprep.subr.bf16.mxu0 0
        %1881 = vmatpush1.bf16.msra.mxu0 0
        %1882 = vmatprep.subr.bf16.mxu0 0
        %1883 = vmatpush1.bf16.msra.mxu0 0
        %1884 = vmatprep.subr.bf16.mxu0 0
        %1885 = vmatpush1.bf16.msra.mxu0 0
        %1886 = vmatprep.subr.bf16.mxu0 0
        %1887 = vmatpush1.bf16.msra.mxu0 0
        %1888 = vmatprep.subr.bf16.mxu0 0
        %1889 = vmatpush1.bf16.msra.mxu0 0
        %1890 = vmatprep.subr.bf16.mxu0 0
        %1891 = vmatpush1.bf16.msra.mxu0 0
        %1892 = vmatprep.subr.bf16.mxu0 0
        %1893 = vmatpush1.bf16.msra.mxu0 0
        %1894 = vmatprep.mubr.bf16.mxu0 0
        %1895 = vmatmul.mubr.bf16.gmra.mrb[0].mxu0 %v1860
        %v1896 = vpop.f32.mrb[0].mxu0
        %v1897 = vadd.f32 0.0, %v1896
        %v1898 = vpop.f32.mrb[0].mxu0
        %v1899 = vpop.f32.mrb[0].mxu0
        %v1900 = vadd.f32 0.0, %v1899
        %v1901 = vpop.f32.mrb[0].mxu0
        %1902 = vdwg.mxu0
        %v1903 = vadd.f32 %v1825, %v1897
        %v1904 = vadd.f32 %v1826, %v1900
        %v1905 = vrot.slane %v1383, 2
        %v1906 = vrot.slane %v1384, 2
        %vm1907 = vcmp.lt.s32.totalorder %v1386, 6
        %v1908 = vsel %vm1907, %v1905, %v1906
        %v1909 = vsel %vm1907, %v1906, %v1905
        %v1910 = vadd.s32 %v1410, 2
        %v1911 = vadd.s32 %v1411, 2
        %vm1912 = vcmp.ge.s32.totalorder %v1910, 0
        %vm1913 = vcmp.ge.s32.totalorder %v1911, 0
        %vm1914 = vcmp.lt.s32.totalorder %v1910, 8
        %vm1915 = vcmp.lt.s32.totalorder %v1911, 8
        %vm1916 = vmand %vm1912, %vm1914
        %vm1917 = vmand %vm1913, %vm1915
        %v1918 = vsel %vm1916, 1, 0
        %v1919 = vsel %vm1917, 1, 0
        %vm1920 = vcmp.eq.s32.totalorder %v1918, 1
        %vm1921 = vcmp.eq.s32.totalorder %v1919, 1
        %v1922 = vsel %vm1920, %v1908, 0.0
        %v1923 = vsel %vm1921, %v1909, 0.0
        %v1924 = vpack.c.bf16 %v1923, %v1922
        %v1929 = vunpack.c.l.b16 %v1436
        %v1930 = vunpack.c.l.b16 %v1437
        %v1931 = vunpack.c.l.b16 %v1438
        %v1932 = vunpack.c.l.b16 %v1439
        %v1933 = vpack.c.b16 %v1930, %v1929
        %v1934 = vpack.c.b16 %v1932, %v1931
        %v1938 = vsel %vm712, %v1924, 0
        %1940 = vmatprep.subr.bf16.mxu0 0
        %1941 = vmatpush1.bf16.msra.mxu0 %v1933
        %1942 = vmatprep.subr.bf16.mxu0 0
        %1943 = vmatpush1.bf16.msra.mxu0 %v1934
        %1944 = vmatprep.subr.bf16.mxu0 0
        %1945 = vmatpush1.bf16.msra.mxu0 0
        %1946 = vmatprep.subr.bf16.mxu0 0
        %1947 = vmatpush1.bf16.msra.mxu0 0
        %1948 = vmatprep.subr.bf16.mxu0 0
        %1949 = vmatpush1.bf16.msra.mxu0 0
        %1950 = vmatprep.subr.bf16.mxu0 0
        %1951 = vmatpush1.bf16.msra.mxu0 0
        %1952 = vmatprep.subr.bf16.mxu0 0
        %1953 = vmatpush1.bf16.msra.mxu0 0
        %1954 = vmatprep.subr.bf16.mxu0 0
        %1955 = vmatpush1.bf16.msra.mxu0 0
        %1956 = vmatprep.subr.bf16.mxu0 0
        %1957 = vmatpush1.bf16.msra.mxu0 0
        %1958 = vmatprep.subr.bf16.mxu0 0
        %1959 = vmatpush1.bf16.msra.mxu0 0
        %1960 = vmatprep.subr.bf16.mxu0 0
        %1961 = vmatpush1.bf16.msra.mxu0 0
        %1962 = vmatprep.subr.bf16.mxu0 0
        %1963 = vmatpush1.bf16.msra.mxu0 0
        %1964 = vmatprep.subr.bf16.mxu0 0
        %1965 = vmatpush1.bf16.msra.mxu0 0
        %1966 = vmatprep.subr.bf16.mxu0 0
        %1967 = vmatpush1.bf16.msra.mxu0 0
        %1968 = vmatprep.subr.bf16.mxu0 0
        %1969 = vmatpush1.bf16.msra.mxu0 0
        %1970 = vmatprep.subr.bf16.mxu0 0
        %1971 = vmatpush1.bf16.msra.mxu0 0
        %1972 = vmatprep.mubr.bf16.mxu0 0
        %1973 = vmatmul.mubr.bf16.gmra.mrb[0].mxu0 %v1938
        %v1974 = vpop.f32.mrb[0].mxu0
        %v1975 = vadd.f32 0.0, %v1974
        %v1976 = vpop.f32.mrb[0].mxu0
        %v1977 = vpop.f32.mrb[0].mxu0
        %v1978 = vadd.f32 0.0, %v1977
        %v1979 = vpop.f32.mrb[0].mxu0
        %1980 = vdwg.mxu0
        %v1981 = vadd.f32 %v1903, %v1975
        %v1982 = vadd.f32 %v1904, %v1978
        %v1983 = vrot.slane %v1383, 3
        %v1984 = vrot.slane %v1384, 3
        %vm1985 = vcmp.lt.s32.totalorder %v1386, 5
        %v1986 = vsel %vm1985, %v1983, %v1984
        %v1987 = vsel %vm1985, %v1984, %v1983
        %v1988 = vadd.s32 %v1410, 3
        %v1989 = vadd.s32 %v1411, 3
        %vm1990 = vcmp.ge.s32.totalorder %v1988, 0
        %vm1991 = vcmp.ge.s32.totalorder %v1989, 0
        %vm1992 = vcmp.lt.s32.totalorder %v1988, 8
        %vm1993 = vcmp.lt.s32.totalorder %v1989, 8
        %vm1994 = vmand %vm1990, %vm1992
        %vm1995 = vmand %vm1991, %vm1993
        %v1996 = vsel %vm1994, 1, 0
        %v1997 = vsel %vm1995, 1, 0
        %vm1998 = vcmp.eq.s32.totalorder %v1996, 1
        %vm1999 = vcmp.eq.s32.totalorder %v1997, 1
        %v2000 = vsel %vm1998, %v1986, 0.0
        %v2001 = vsel %vm1999, %v1987, 0.0
        %v2002 = vpack.c.bf16 %v2001, %v2000
        %v2007 = vunpack.c.l.b16 %v1440
        %v2008 = vunpack.c.l.b16 %v1441
        %v2009 = vunpack.c.l.b16 %v1442
        %v2010 = vunpack.c.l.b16 %v1443
        %v2011 = vpack.c.b16 %v2008, %v2007
        %v2012 = vpack.c.b16 %v2010, %v2009
        %v2016 = vsel %vm712, %v2002, 0
        %2018 = vmatprep.subr.bf16.mxu0 0
        %2019 = vmatpush1.bf16.msra.mxu0 %v2011
        %2020 = vmatprep.subr.bf16.mxu0 0
        %2021 = vmatpush1.bf16.msra.mxu0 %v2012
        %2022 = vmatprep.subr.bf16.mxu0 0
        %2023 = vmatpush1.bf16.msra.mxu0 0
        %2024 = vmatprep.subr.bf16.mxu0 0
        %2025 = vmatpush1.bf16.msra.mxu0 0
        %2026 = vmatprep.subr.bf16.mxu0 0
        %2027 = vmatpush1.bf16.msra.mxu0 0
        %2028 = vmatprep.subr.bf16.mxu0 0
        %2029 = vmatpush1.bf16.msra.mxu0 0
        %2030 = vmatprep.subr.bf16.mxu0 0
        %2031 = vmatpush1.bf16.msra.mxu0 0
        %2032 = vmatprep.subr.bf16.mxu0 0
        %2033 = vmatpush1.bf16.msra.mxu0 0
        %2034 = vmatprep.subr.bf16.mxu0 0
        %2035 = vmatpush1.bf16.msra.mxu0 0
        %2036 = vmatprep.subr.bf16.mxu0 0
        %2037 = vmatpush1.bf16.msra.mxu0 0
        %2038 = vmatprep.subr.bf16.mxu0 0
        %2039 = vmatpush1.bf16.msra.mxu0 0
        %2040 = vmatprep.subr.bf16.mxu0 0
        %2041 = vmatpush1.bf16.msra.mxu0 0
        %2042 = vmatprep.subr.bf16.mxu0 0
        %2043 = vmatpush1.bf16.msra.mxu0 0
        %2044 = vmatprep.subr.bf16.mxu0 0
        %2045 = vmatpush1.bf16.msra.mxu0 0
        %2046 = vmatprep.subr.bf16.mxu0 0
        %2047 = vmatpush1.bf16.msra.mxu0 0
        %2048 = vmatprep.subr.bf16.mxu0 0
        %2049 = vmatpush1.bf16.msra.mxu0 0
        %2050 = vmatprep.mubr.bf16.mxu0 0
        %2051 = vmatmul.mubr.bf16.gmra.mrb[0].mxu0 %v2016
        %v2052 = vpop.f32.mrb[0].mxu0
        %v2053 = vadd.f32 0.0, %v2052
        %v2054 = vpop.f32.mrb[0].mxu0
        %v2055 = vpop.f32.mrb[0].mxu0
        %v2056 = vadd.f32 0.0, %v2055
        %v2057 = vpop.f32.mrb[0].mxu0
        %2058 = vdwg.mxu0
        %v2059 = vadd.f32 %v1981, %v2053
        %v2060 = vadd.f32 %v1982, %v2056
        %v2061 = vadd.s32 %v1410, 4
        %v2062 = vadd.s32 %v1411, 4
        %vm2063 = vcmp.ge.s32.totalorder %v2061, 0
        %vm2064 = vcmp.ge.s32.totalorder %v2062, 0
        %vm2065 = vcmp.lt.s32.totalorder %v2061, 8
        %vm2066 = vcmp.lt.s32.totalorder %v2062, 8
        %vm2067 = vmand %vm2063, %vm2065
        %vm2068 = vmand %vm2064, %vm2066
        %v2069 = vsel %vm2067, 1, 0
        %v2070 = vsel %vm2068, 1, 0
        %vm2071 = vcmp.eq.s32.totalorder %v2069, 1
        %vm2072 = vcmp.eq.s32.totalorder %v2070, 1
        %v2073 = vsel %vm2071, %v1451, 0.0
        %v2074 = vsel %vm2072, %v1452, 0.0
        %v2075 = vpack.c.bf16 %v2074, %v2073
        %v2080 = vunpack.c.l.b16 %v1444
        %v2081 = vunpack.c.l.b16 %v1445
        %v2082 = vunpack.c.l.b16 %v1446
        %v2083 = vunpack.c.l.b16 %v1447
        %v2084 = vpack.c.b16 %v2081, %v2080
        %v2085 = vpack.c.b16 %v2083, %v2082
        %v2089 = vsel %vm712, %v2075, 0
        %2091 = vmatprep.subr.bf16.mxu0 0
        %2092 = vmatpush1.bf16.msra.mxu0 %v2084
        %2093 = vmatprep.subr.bf16.mxu0 0
        %2094 = vmatpush1.bf16.msra.mxu0 %v2085
        %2095 = vmatprep.subr.bf16.mxu0 0
        %2096 = vmatpush1.bf16.msra.mxu0 0
        %2097 = vmatprep.subr.bf16.mxu0 0
        %2098 = vmatpush1.bf16.msra.mxu0 0
        %2099 = vmatprep.subr.bf16.mxu0 0
        %2100 = vmatpush1.bf16.msra.mxu0 0
        %2101 = vmatprep.subr.bf16.mxu0 0
        %2102 = vmatpush1.bf16.msra.mxu0 0
        %2103 = vmatprep.subr.bf16.mxu0 0
        %2104 = vmatpush1.bf16.msra.mxu0 0
        %2105 = vmatprep.subr.bf16.mxu0 0
        %2106 = vmatpush1.bf16.msra.mxu0 0
        %2107 = vmatprep.subr.bf16.mxu0 0
        %2108 = vmatpush1.bf16.msra.mxu0 0
        %2109 = vmatprep.subr.bf16.mxu0 0
        %2110 = vmatpush1.bf16.msra.mxu0 0
        %2111 = vmatprep.subr.bf16.mxu0 0
        %2112 = vmatpush1.bf16.msra.mxu0 0
        %2113 = vmatprep.subr.bf16.mxu0 0
        %2114 = vmatpush1.bf16.msra.mxu0 0
        %2115 = vmatprep.subr.bf16.mxu0 0
        %2116 = vmatpush1.bf16.msra.mxu0 0
        %2117 = vmatprep.subr.bf16.mxu0 0
        %2118 = vmatpush1.bf16.msra.mxu0 0
        %2119 = vmatprep.subr.bf16.mxu0 0
        %2120 = vmatpush1.bf16.msra.mxu0 0
        %2121 = vmatprep.subr.bf16.mxu0 0
        %2122 = vmatpush1.bf16.msra.mxu0 0
        %2123 = vmatprep.mubr.bf16.mxu0 0
        %2124 = vmatmul.mubr.bf16.gmra.mrb[0].mxu0 %v2089
        %v2125 = vpop.f32.mrb[0].mxu0
        %v2126 = vadd.f32 0.0, %v2125
        %v2127 = vpop.f32.mrb[0].mxu0
        %v2128 = vpop.f32.mrb[0].mxu0
        %v2129 = vadd.f32 0.0, %v2128
        %v2130 = vpop.f32.mrb[0].mxu0
        %2131 = vdwg.mxu0
        %v2132 = vadd.f32 %v2059, %v2126
        %v2133 = vadd.f32 %v2060, %v2129
        %v2134 = vld [vmem:[%s598] sm:$0x1]
        %v2136 = vlaneseq
        %v2137 = vshrl.u32 %v2136, 7
        %v2138 = vsub.s32 0, %v2137
        %v2139 = vrot.slane %v2134, %v2138
        %v2141 = vadd.f32 %v2132, %v2139
        %v2142 = vadd.f32 %v2133, %v2139
        %v2143 = vmax.f32 %v2141, 0.0
        %v2144 = vmax.f32 %v2142, 0.0
        %v2145 = vpack.c.bf16 %v2144, %v2143
        %v2146 = vld [vmem:[%s607] sm:$0xf]
        %v2147 = vld [vmem:[%s607 + $0x4] sm:$0xf]
        %v2148 = vld [vmem:[%s607 + $0x8] sm:$0xf]
        %v2149 = vld [vmem:[%s607 + $0xc] sm:$0xf]
        %v2150 = vld [vmem:[%s607 + $0x10] sm:$0xf]
        %v2151 = vld [vmem:[%s607 + $0x14] sm:$0xf]
        %v2152 = vld [vmem:[%s607 + $0x18] sm:$0xf]
        %v2153 = vld [vmem:[%s607 + $0x1c] sm:$0xf]
        %v2154 = vlaneseq
        %v2155 = vshrl.u32 %v2154, 7
        %v2156 = vsub.s32 3, %v2155
        %v2157 = vrot.slane %v688, %v2156
        %v2166 = vunpack.c.l.b16 %v2146
        %v2167 = vunpack.c.l.b16 %v2147
        %v2168 = vunpack.c.l.b16 %v2148
        %v2169 = vunpack.c.l.b16 %v2149
        %v2170 = vunpack.c.l.b16 %v2150
        %v2171 = vunpack.c.l.b16 %v2151
        %v2172 = vunpack.c.l.b16 %v2152
        %v2173 = vunpack.c.l.b16 %v2153
        %v2174 = vpack.c.b16 %v2167, %v2166
        %v2175 = vpack.c.b16 %v2169, %v2168
        %v2176 = vpack.c.b16 %v2171, %v2170
        %v2177 = vpack.c.b16 %v2173, %v2172
        %vm2182 = vcmask 523264
        %v2184 = vsel %vm2182, %v2145, 0
        %2186 = vmatprep.subr.bf16.mxu0 0
        %2187 = vmatpush1.bf16.msra.mxu0 %v2174
        %2188 = vmatprep.subr.bf16.mxu0 0
        %2189 = vmatpush1.bf16.msra.mxu0 %v2175
        %2190 = vmatprep.subr.bf16.mxu0 0
        %2191 = vmatpush1.bf16.msra.mxu0 %v2176
        %2192 = vmatprep.subr.bf16.mxu0 0
        %2193 = vmatpush1.bf16.msra.mxu0 %v2177
        %2194 = vmatprep.subr.bf16.mxu0 0
        %2195 = vmatpush1.bf16.msra.mxu0 0
        %2196 = vmatprep.subr.bf16.mxu0 0
        %2197 = vmatpush1.bf16.msra.mxu0 0
        %2198 = vmatprep.subr.bf16.mxu0 0
        %2199 = vmatpush1.bf16.msra.mxu0 0
        %2200 = vmatprep.subr.bf16.mxu0 0
        %2201 = vmatpush1.bf16.msra.mxu0 0
        %2202 = vmatprep.subr.bf16.mxu0 0
        %2203 = vmatpush1.bf16.msra.mxu0 0
        %2204 = vmatprep.subr.bf16.mxu0 0
        %2205 = vmatpush1.bf16.msra.mxu0 0
        %2206 = vmatprep.subr.bf16.mxu0 0
        %2207 = vmatpush1.bf16.msra.mxu0 0
        %2208 = vmatprep.subr.bf16.mxu0 0
        %2209 = vmatpush1.bf16.msra.mxu0 0
        %2210 = vmatprep.subr.bf16.mxu0 0
        %2211 = vmatpush1.bf16.msra.mxu0 0
        %2212 = vmatprep.subr.bf16.mxu0 0
        %2213 = vmatpush1.bf16.msra.mxu0 0
        %2214 = vmatprep.subr.bf16.mxu0 0
        %2215 = vmatpush1.bf16.msra.mxu0 0
        %2216 = vmatprep.subr.bf16.mxu0 0
        %2217 = vmatpush1.bf16.msra.mxu0 0
        %2218 = vmatprep.mubr.bf16.mxu0 0
        %2219 = vmatmul.mubr.bf16.gmra.mrb[0].mxu0 %v2184
        %v2220 = vpop.f32.mrb[0].mxu0
        %v2221 = vadd.f32 %v2157, %v2220
        %v2222 = vpop.f32.mrb[0].mxu0
        %v2223 = vpop.f32.mrb[0].mxu0
        %v2224 = vadd.f32 %v2157, %v2223
        %v2225 = vpop.f32.mrb[0].mxu0
        %2226 = vdwg.mxu0
        %v2227 = vadd.f32 %v2221, %v1383
        %v2228 = vadd.f32 %v2224, %v1384
        %v2229 = vsel %vm712, %v2227, 0.0
        %2230 = vadd.xlane.f32.xlu0 %v2229
        %v2231 = vpop.xlane.xlu0 %2230
        %v2232 = vsel %vm712, %v2228, 0.0
        %2233 = vadd.xlane.f32.xlu0 %v2232
        %v2234 = vpop.xlane.xlu0 %2233
        %v2235 = vmul.f32 %v2231, %v1340
        %v2236 = vmul.f32 %v2234, %v1340
        %v2237 = vsub.f32 %v2227, %v2235
        %v2238 = vsub.f32 %v2228, %v2236
        %v2239 = vmul.f32 %v2237, %v2237
        %v2240 = vmul.f32 %v2238, %v2238
        %v2241 = vsel %vm712, %v2239, 0.0
        %2242 = vadd.xlane.f32.xlu0 %v2241
        %v2243 = vpop.xlane.xlu0 %2242
        %v2244 = vsel %vm712, %v2240, 0.0
        %2245 = vadd.xlane.f32.xlu0 %v2244
        %v2246 = vpop.xlane.xlu0 %2245
        %v2247 = vmul.f32 %v2243, %v1340
        %v2248 = vmul.f32 %v2246, %v1340
        %v2249 = vadd.f32 %v2247, 1e-05
        %v2250 = vadd.f32 %v2248, 1e-05
        %v2251 = vrsqrt.pop %v2249
        %v2252 = vrsqrt.pop %v2250
        %v2253 = vmul.f32 %v2237, %v2251
        %v2254 = vmul.f32 %v2238, %v2252
        %v2255 = vlaneseq
        %v2256 = vshrl.u32 %v2255, 7
        %v2257 = vsub.s32 4, %v2256
        %v2258 = vrot.slane %v688, %v2257
        %v2259 = vmul.f32 %v2253, %v2258
        %v2260 = vmul.f32 %v2254, %v2258
        %v2261 = vlaneseq
        %v2262 = vshrl.u32 %v2261, 7
        %v2263 = vsub.s32 5, %v2262
        %v2264 = vrot.slane %v688, %v2263
        %v2265 = vadd.f32 %v2259, %v2264
        %v2266 = vadd.f32 %v2260, %v2264
        %v2267 = vmul.f32 %v2265, %v1376
        %v2268 = vmul.f32 %v2266, %v1381
        %2269 = vst.msk [vmem:[#allocation19] sm:$0xff] %vm712, %v2267
        %2270 = vst.msk [vmem:[#allocation19 + $0x8] sm:$0xff] %vm712, %v2268
        // Predicated region
        $region105: #{_lambda_.1} parent=59 // pred_check
          %p2271 = pneg %p326
        $region106: #{_lambda_.1} parent=59 // pred_check_branch
          %2273 = sbr.rel (%p2271) target = $region108
        $region107: #{_lambda_.1} parent=59 // pred_region
          %s2274 = smul.u32 2, %s40
          %s2276 = ssub.s32 256, 256
          %2277 = vsyncadd [#allocation4], %s2276
          %s2278 = smul.addr %s2274, 128
          %s2279 = scalar_lea.hbm %s10, %s2278
          %s2280 = sshll.u32 [#allocation19], 4
          %s2281 = int_to_ptr.vmem [resolvable:$true] %s2280
          %2286 = dma.vmem_to_hbm [thread:$0]  %s2281, 256, %s2279, [#allocation4], 128, 128, 8
        $region108: #{_lambda_.1} parent=59 // pred_fallthru
          _
        // Predicated region
        $region109: #{_lambda_.1} parent=59 // pred_check
          %p2287 = pneg %p326
        $region110: #{_lambda_.1} parent=59 // pred_check_branch
          %2289 = sbr.rel (%p2287) target = $region112
        $region111: #{_lambda_.1} parent=59 // pred_region
          %2290 = dma.done [#allocation4], 256
        $region112: #{_lambda_.1} parent=59 // pred_fallthru
          _
      $region60: #{_lambda_.1} parent=5 // pred_fallthru
        _
      %p2291 = scmp.le.s32.totalorder 2, %s31
      // Predicated region
      $region113: #{_lambda_.1} parent=5 // pred_check
        %p2292 = pneg %p2291
      $region114: #{_lambda_.1} parent=5 // pred_check_branch
        %2294 = sbr.rel (%p2292) target = $region116
      $region115: #{_lambda_.1} parent=5 // pred_region
        %s2295 = ssub.s32 %s31, 2
      $region116: #{_lambda_.1} parent=5 // pred_fallthru
        _
    $region6: #{_lambda_.1} parent=1 // loop_footer
      %s35 = sadd.s32 1, %s31
    $region7: #{_lambda_.1} parent=1 // loop_footer_branch
      %30 = sbr.rel target = $region3
    $region8: #{_lambda_.1} parent=1 // loop_exit
      _
    %2296 = vsyncpa [#allocation3], 1
    %s2297 = scalar_lea.sflag [#allocation3], 1
    %2298 = vsyncpa %s2297, 1
    %2299 = vsyncpa [#allocation6], 1
    %2300 = vsyncpa [#allocation9], 1
    %s2301 = scalar_lea.sflag [#allocation9], 1
    %2302 = vsyncpa %s2301, 1
    %2303 = vsyncpa [#allocation12], 1
    %s2304 = scalar_lea.sflag [#allocation12], 1
    %2305 = vsyncpa %s2304, 1
    %2306 = vsyncpa [#allocation15], 1
    %s2307 = scalar_lea.sflag [#allocation15], 1
    %2308 = vsyncpa %s2307, 1
    %2309 = vsyncpa [#allocation18], 1
    %s2310 = scalar_lea.sflag [#allocation18], 1
    %2311 = vsyncpa %s2310, 1
    %2312 = vsyncpa [#allocation4], 1
    %s2313 = scalar_lea.sflag [#allocation4], 1
    %2314 = vsyncpa %s2313, 1

</llo_original>
